<compile_context>
chip_gen: v5e
topology: v5e:2x2
jax: 0.10.0
libtpu: 0.0.40
codegen_flags: <defaults>
</compile_context>

<pallas_src>
import functools

import jax
import jax.numpy as jnp
from jax import lax
from jax.experimental import pallas as pl
from jax.experimental.pallas import tpu as pltpu


def _round_up(x, m):
    return ((x + m - 1) // m) * m


def _mlp_kernel(x_ref, w1_ref, wh_ref, bh_ref, w4_ref, b4_ref, o_ref):
    """One batch tile.

    x_ref : (TB, in_dim) natural-layout input tile
    w1_ref: (H, in_dim)  layer-1 weight (torch (out, in) layout)
    wh_ref: (2, H, H)    layer-2/3 weights
    bh_ref: (3, H, 1)    layer-1/2/3 biases
    w4_ref: (dim, H)     layer-4 weight
    b4_ref: (dim, 1)     layer-4 bias
    o_ref : (dim, TB)    output tile (lane-dense, transposed layout)
    """
    # Contract on the feature axis of both operands: (H, in_dim) x (TB, in_dim)
    # -> (H, TB).  The MXU does the layout flip; activations are lane-dense.
    h = lax.dot_general(
        w1_ref[...], x_ref[...],
        dimension_numbers=(((1,), (1,)), ((), ())),
        preferred_element_type=jnp.float32)
    h = jnp.tanh(h + bh_ref[0])
    h = jnp.tanh(
        jnp.dot(wh_ref[0], h, preferred_element_type=jnp.float32) + bh_ref[1])
    h = jnp.tanh(
        jnp.dot(wh_ref[1], h, preferred_element_type=jnp.float32) + bh_ref[2])
    y = jnp.dot(w4_ref[...], h, preferred_element_type=jnp.float32) + b4_ref[...]
    o_ref[...] = y.astype(o_ref.dtype)


@functools.partial(jax.jit, static_argnames=("block_b",))
def net_nomatrix16_v2(x, params, *, block_b=8192):
    """Fused MLP forward. x: (B, 2*dim-1) float32. Returns (B, dim) float32."""
    (w1, b1), (w2, b2), (w3, b3), (w4, b4) = params
    B, in_dim = x.shape
    H = w2.shape[0]
    dim = w4.shape[1]
    f32 = jnp.float32

    # ---- batch tile selection --------------------------------------------
    # Multiple of 256 (full MXU width on v6e/v7x, 128-aligned for v5e), and
    # capped so that we get >= 2 grid steps whenever B allows it (keeps both
    # v7x TensorCores busy via the "parallel" axis).  Harden user block_b.
    block_b = _round_up(max(int(block_b), 256), 256)
    TB = min(block_b, _round_up(pl.cdiv(B, 2), 256))
    TB = max(TB, 256)
    n_tiles = pl.cdiv(B, TB)          # ragged last block handled by Pallas

    # ---- one-time parameter prep: torch (out, in) layout, packed slabs ----
    w1k = w1.T.astype(f32)                                        # (H, in_dim)
    whk = jnp.stack([w2.T, w3.T]).astype(f32)                     # (2, H, H)
    bhk = jnp.stack([b1.reshape(H, 1),
                     b2.reshape(H, 1),
                     b3.reshape(H, 1)]).astype(f32)               # (3, H, 1)
    w4k = w4.T.astype(f32)                                        # (dim, H)
    b4k = b4.reshape(dim, 1).astype(f32)                          # (dim, 1)

    out_t = pl.pallas_call(
        _mlp_kernel,
        out_shape=jax.ShapeDtypeStruct((dim, B), jnp.float32),
        grid=(n_tiles,),
        in_specs=[
            # x: natural layout, batch-tiled (last dim == full array dim -> legal)
            pl.BlockSpec((TB, in_dim), lambda i: (i, 0)),
            # resident parameters (constant index maps -> DMA'd once)
            pl.BlockSpec((H, in_dim), lambda i: (0, 0)),
            pl.BlockSpec((2, H, H), lambda i: (0, 0, 0)),
            pl.BlockSpec((3, H, 1), lambda i: (0, 0, 0)),
            pl.BlockSpec((dim, H), lambda i: (0, 0)),
            pl.BlockSpec((dim, 1), lambda i: (0, 0)),
        ],
        out_specs=pl.BlockSpec((dim, TB), lambda i: (0, i)),
        compiler_params=pltpu.CompilerParams(
            dimension_semantics=("parallel",),
            vmem_limit_bytes=32 * 1024 * 1024),
    )(x.astype(f32), w1k, whk, bhk, w4k, b4k)

    # Single small transpose back to the module's (B, dim) contract.
    return out_t.T


def init_params(key, dim, hidden_nodes=16):
    """Deterministic init mimicking torch.nn.Linear defaults
    (uniform(-1/sqrt(fan_in), 1/sqrt(fan_in)) for weight and bias).
    Weights are returned as (in_features, out_features); biases as (1, out)."""
    in_dim = 2 * dim - 1
    layer_dims = [(in_dim, hidden_nodes),
                  (hidden_nodes, hidden_nodes),
                  (hidden_nodes, hidden_nodes),
                  (hidden_nodes, dim)]
    params = []
    for (fan_in, fan_out) in layer_dims:
        key, kw, kb = jax.random.split(key, 3)
        bound = 1.0 / jnp.sqrt(jnp.float32(fan_in))
        w = jax.random.uniform(kw, (fan_in, fan_out), jnp.float32,
                               minval=-bound, maxval=bound)
        b = jax.random.uniform(kb, (1, fan_out), jnp.float32,
                               minval=-bound, maxval=bound)
        params.append((w, b))
    return params


def reference_forward(x, params):
    h = x
    for i, (w, b) in enumerate(params):
        h = h @ w + b
        if i < len(params) - 1:
            h = jnp.tanh(h)
    return h


if __name__ == "__main__":
    dim = 8            # -> input features = 2*dim - 1 = 15
    hidden = 16
    batch = 2500       # not a multiple of the batch tile -> exercises the
                       # ragged last block (masked OOB stores)

    key = jax.random.PRNGKey(0)
    key, kx = jax.random.split(key)
    params = init_params(key, dim, hidden)
    x = jax.random.normal(kx, (batch, 2 * dim - 1), jnp.float32)

    out = net_nomatrix16_v2(x, params)
    out = jax.block_until_ready(out)

    ref = reference_forward(x, params)
    assert out.shape == (batch, dim), out.shape
    err = float(jnp.max(jnp.abs(out - ref)))
    assert err < 1e-4, f"mismatch vs JAX reference: max abs err {err}"

    print("KERNEL_OK")
</pallas_src>

<mosaic_0001>
module attributes {stable_mosaic.version = 11 : i64} {
  func.func @_mlp_kernel(%arg0: i32, %arg1: memref<1280x15xf32, #tpu.memory_space<vmem>>, %arg2: memref<16x15xf32, #tpu.memory_space<vmem>>, %arg3: memref<2x16x16xf32, #tpu.memory_space<vmem>>, %arg4: memref<3x16x1xf32, #tpu.memory_space<vmem>>, %arg5: memref<8x16xf32, #tpu.memory_space<vmem>>, %arg6: memref<8x1xf32, #tpu.memory_space<vmem>>, %arg7: memref<8x1280xf32, #tpu.memory_space<vmem>>) attributes {dimension_semantics = [#tpu.dimension_semantics<parallel>], iteration_bounds = array<i64: 2>, scalar_prefetch = 0 : i64, scratch_operands = 0 : i64, tpu.core_type = #tpu.core_type<tc>, window_params = [{transform_indices = @transform_0, window_bounds = array<i64: 1280, 15>}, {pipeline_mode = #tpu.pipeline_mode<synchronous>, transform_indices = @transform_1, window_bounds = array<i64: 16, 15>}, {pipeline_mode = #tpu.pipeline_mode<synchronous>, transform_indices = @transform_2, window_bounds = array<i64: 2, 16, 16>}, {pipeline_mode = #tpu.pipeline_mode<synchronous>, transform_indices = @transform_3, window_bounds = array<i64: 3, 16, 1>}, {pipeline_mode = #tpu.pipeline_mode<synchronous>, transform_indices = @transform_4, window_bounds = array<i64: 8, 16>}, {pipeline_mode = #tpu.pipeline_mode<synchronous>, transform_indices = @transform_5, window_bounds = array<i64: 8, 1>}, {transform_indices = @transform_6, window_bounds = array<i64: 8, 1280>}]} {
    %c0 = arith.constant 0 : index
    %c0_0 = arith.constant 0 : index
    %0 = vector.load %arg2[%c0, %c0_0] : memref<16x15xf32, #tpu.memory_space<vmem>>, vector<16x15xf32>
    %c0_1 = arith.constant 0 : index
    %c0_2 = arith.constant 0 : index
    %1 = vector.load %arg1[%c0_1, %c0_2] : memref<1280x15xf32, #tpu.memory_space<vmem>>, vector<1280x15xf32>
    %cst = arith.constant dense<0.000000e+00> : vector<16x1280xf32>
    %2 = tpu.matmul %0, %1, %cst {dimension_numbers = #tpu.dot_dimension_numbers<[1], [1], [0], [0], [0, 0, 1, 0], [], []>} : vector<16x15xf32>, vector<1280x15xf32>, vector<16x1280xf32> -> vector<16x1280xf32>
    %c0_3 = arith.constant 0 : index
    %c0_4 = arith.constant 0 : index
    %c0_5 = arith.constant 0 : index
    %3 = vector.load %arg4[%c0_3, %c0_4, %c0_5] : memref<3x16x1xf32, #tpu.memory_space<vmem>>, vector<1x16x1xf32>
    %4 = vector.shape_cast %3 : vector<1x16x1xf32> to vector<16x1xf32>
    %5 = vector.broadcast %4 : vector<16x1xf32> to vector<16x1280xf32>
    %6 = arith.addf %2, %5 : vector<16x1280xf32>
    %7 = math.tanh %6 : vector<16x1280xf32>
    %c0_6 = arith.constant 0 : index
    %c0_7 = arith.constant 0 : index
    %c0_8 = arith.constant 0 : index
    %8 = vector.load %arg3[%c0_6, %c0_7, %c0_8] : memref<2x16x16xf32, #tpu.memory_space<vmem>>, vector<1x16x16xf32>
    %9 = vector.shape_cast %8 : vector<1x16x16xf32> to vector<16x16xf32>
    %cst_9 = arith.constant dense<0.000000e+00> : vector<16x1280xf32>
    %10 = tpu.matmul %9, %7, %cst_9 {dimension_numbers = #tpu.dot_dimension_numbers<[1], [0], [0], [1], [0, 0, 1, 1], [], []>} : vector<16x16xf32>, vector<16x1280xf32>, vector<16x1280xf32> -> vector<16x1280xf32>
    %c1 = arith.constant 1 : index
    %c0_10 = arith.constant 0 : index
    %c0_11 = arith.constant 0 : index
    %11 = vector.load %arg4[%c1, %c0_10, %c0_11] : memref<3x16x1xf32, #tpu.memory_space<vmem>>, vector<1x16x1xf32>
    %12 = vector.shape_cast %11 : vector<1x16x1xf32> to vector<16x1xf32>
    %13 = vector.broadcast %12 : vector<16x1xf32> to vector<16x1280xf32>
    %14 = arith.addf %10, %13 : vector<16x1280xf32>
    %15 = math.tanh %14 : vector<16x1280xf32>
    %c1_12 = arith.constant 1 : index
    %c0_13 = arith.constant 0 : index
    %c0_14 = arith.constant 0 : index
    %16 = vector.load %arg3[%c1_12, %c0_13, %c0_14] : memref<2x16x16xf32, #tpu.memory_space<vmem>>, vector<1x16x16xf32>
    %17 = vector.shape_cast %16 : vector<1x16x16xf32> to vector<16x16xf32>
    %cst_15 = arith.constant dense<0.000000e+00> : vector<16x1280xf32>
    %18 = tpu.matmul %17, %15, %cst_15 {dimension_numbers = #tpu.dot_dimension_numbers<[1], [0], [0], [1], [0, 0, 1, 1], [], []>} : vector<16x16xf32>, vector<16x1280xf32>, vector<16x1280xf32> -> vector<16x1280xf32>
    %c2 = arith.constant 2 : index
    %c0_16 = arith.constant 0 : index
    %c0_17 = arith.constant 0 : index
    %19 = vector.load %arg4[%c2, %c0_16, %c0_17] : memref<3x16x1xf32, #tpu.memory_space<vmem>>, vector<1x16x1xf32>
    %20 = vector.shape_cast %19 : vector<1x16x1xf32> to vector<16x1xf32>
    %21 = vector.broadcast %20 : vector<16x1xf32> to vector<16x1280xf32>
    %22 = arith.addf %18, %21 : vector<16x1280xf32>
    %23 = math.tanh %22 : vector<16x1280xf32>
    %c0_18 = arith.constant 0 : index
    %c0_19 = arith.constant 0 : index
    %24 = vector.load %arg5[%c0_18, %c0_19] : memref<8x16xf32, #tpu.memory_space<vmem>>, vector<8x16xf32>
    %cst_20 = arith.constant dense<0.000000e+00> : vector<8x1280xf32>
    %25 = tpu.matmul %24, %23, %cst_20 {dimension_numbers = #tpu.dot_dimension_numbers<[1], [0], [0], [1], [0, 0, 1, 1], [], []>} : vector<8x16xf32>, vector<16x1280xf32>, vector<8x1280xf32> -> vector<8x1280xf32>
    %c0_21 = arith.constant 0 : index
    %c0_22 = arith.constant 0 : index
    %26 = vector.load %arg6[%c0_21, %c0_22] : memref<8x1xf32, #tpu.memory_space<vmem>>, vector<8x1xf32>
    %27 = vector.broadcast %26 : vector<8x1xf32> to vector<8x1280xf32>
    %28 = arith.addf %25, %27 : vector<8x1280xf32>
    %c0_23 = arith.constant 0 : index
    %c0_24 = arith.constant 0 : index
    %29 = vector.load %arg7[%c0_23, %c0_24] : memref<8x1280xf32, #tpu.memory_space<vmem>>, vector<8x1280xf32>
    tpu.vector_store %arg7[%c0_23, %c0_24], %28 {strides = array<i32>} : memref<8x1280xf32, #tpu.memory_space<vmem>>, vector<8x1280xf32>,
    return
  }
  func.func @transform_0(%arg0: i32) -> (i32, i32) {
    %c0_i32 = arith.constant 0 : i32
    %c0_i32_0 = arith.constant 0 : i32
    return %arg0, %c0_i32 : i32, i32
  }
  func.func @transform_1(%arg0: i32) -> (i32, i32) {
    %c0_i32 = arith.constant 0 : i32
    %c0_i32_0 = arith.constant 0 : i32
    %c0_i32_1 = arith.constant 0 : i32
    return %c0_i32, %c0_i32_0 : i32, i32
  }
  func.func @transform_2(%arg0: i32) -> (i32, i32, i32) {
    %c0_i32 = arith.constant 0 : i32
    %c0_i32_0 = arith.constant 0 : i32
    %c0_i32_1 = arith.constant 0 : i32
    %c0_i32_2 = arith.constant 0 : i32
    return %c0_i32, %c0_i32_0, %c0_i32_1 : i32, i32, i32
  }
  func.func @transform_3(%arg0: i32) -> (i32, i32, i32) {
    %c0_i32 = arith.constant 0 : i32
    %c0_i32_0 = arith.constant 0 : i32
    %c0_i32_1 = arith.constant 0 : i32
    %c0_i32_2 = arith.constant 0 : i32
    return %c0_i32, %c0_i32_0, %c0_i32_1 : i32, i32, i32
  }
  func.func @transform_4(%arg0: i32) -> (i32, i32) {
    %c0_i32 = arith.constant 0 : i32
    %c0_i32_0 = arith.constant 0 : i32
    %c0_i32_1 = arith.constant 0 : i32
    return %c0_i32, %c0_i32_0 : i32, i32
  }
  func.func @transform_5(%arg0: i32) -> (i32, i32) {
    %c0_i32 = arith.constant 0 : i32
    %c0_i32_0 = arith.constant 0 : i32
    %c0_i32_1 = arith.constant 0 : i32
    return %c0_i32, %c0_i32_0 : i32, i32
  }
  func.func @transform_6(%arg0: i32) -> (i32, i32) {
    %c0_i32 = arith.constant 0 : i32
    %c0_i32_0 = arith.constant 0 : i32
    return %c0_i32, %arg0 : i32, i32
  }
}

</mosaic_0001>

<llo_original>
// kernel: net_nomatrix16_v2.1
$region0: #{net_nomatrix16_v2.1}
  #allocation0 [shape = 'u32[]', space=smem, size = 0x4, offset = 0x4, fixed_abs, tag = 'smem constant byte address 0x4 - core index']
  #allocation1 [shape = 'u32[72,128]{1,0:T(1,128)}', space=vmem, size = 0x9000, scoped, tag = 'internal scratch']
  %s0 = inlined_call_operand.vmem [shape: f32[2500,15], index: 0, kind: input, shape index: {}]
  %s1 = inlined_call_operand.vmem [shape: f32[16,15], index: 1, kind: input, shape index: {}]
  %s2 = inlined_call_operand.vmem [shape: f32[2,16,16], index: 2, kind: input, shape index: {}]
  %s3 = inlined_call_operand.vmem [shape: f32[3,16,1], index: 3, kind: input, shape index: {}]
  %s4 = inlined_call_operand.vmem [shape: f32[8,16], index: 4, kind: input, shape index: {}]
  %s5 = inlined_call_operand.vmem [shape: f32[8,1], index: 5, kind: input, shape index: {}]
  %s6 = inlined_call_operand.hbm [shape: f32[8,2500], index: 6, kind: output, shape index: {}]
  %s7 = sld [smem:[#allocation0]]
  $region57: #{net_nomatrix16_v2.1} parent=0
    _
  %s9 = ssub.s32 1, %s7
  %s10 = scalar_select 0, %s9, %s7
  $region1: #{net_nomatrix16_v2.1} parent=0
    #allocation2 [shape = 'u8[81920]{0}', space=vmem, size = 0x14000, scoped, tag = 'output window, operand 0']
    #allocation3 [shape = 's32[2]{0}', space=sflag, size = 0x8, scoped, tag = 'scoped memory for net_nomatrix16_v2.1']
    %11 = vsyncpa [#allocation3], 0
    %s12 = scalar_lea.sflag [#allocation3], 1
    %13 = vsyncpa %s12, 0
    loop: start=0, step=1, limit=4
    $region2: #{net_nomatrix16_v2.1} parent=1 // loop_pre_header
      _
    $region3: #{net_nomatrix16_v2.1} parent=1 // loop_header
      %s15 = sphi 0, %s19
      %p16 = scmp.ge.s32.totalorder %s15, 4
      %s25 = sphi 0, %s27
      %s28 = sphi 0, %s25
      %s29 = sphi 0, %s28
      %s45 = sphi 0, %s29
      %s49 = sphi 0, %s49
      %s51 = sphi 0, %s49
      %s52 = sphi 0, %s51
      %s66 = sphi 0, %s52
      %s70 = sphi 0, %s70
      %s72 = sphi 0, %s70
      %s73 = sphi 0, %s72
      %s87 = sphi 0, %s73
      %s91 = sphi 0, %s91
      %s93 = sphi 0, %s91
      %s94 = sphi 0, %s93
      %s108 = sphi 0, %s94
      %s112 = sphi 0, %s112
      %s114 = sphi 0, %s112
      %s115 = sphi 0, %s114
      %s129 = sphi 0, %s115
      %s133 = sphi 0, %s133
      %s135 = sphi 0, %s133
      %s136 = sphi 0, %s135
      %s150 = sphi 0, %s136
      %s156 = sphi 0, %s158
      %s159 = sphi 0, %s156
      %s160 = sphi 0, %s159
      %s176 = sphi 0, %s160
    $region4: #{net_nomatrix16_v2.1} parent=1 // loop_header_branch
      %18 = sbr.rel (%p16) target = $region8
    $region5: #{net_nomatrix16_v2.1} parent=1 // loop_body
      %s20 = ssub.s32 %s15, 1
      %s21 = ssub.s32 %s15, 2
      %s22 = sadd.s32 %s15, 1
      %s23 = ssub.s32 %s15, %s22
      %p24 = scmp.eq.s32.totalorder %s23, 0
      %s26 = sadd.s32 %s25, 1
      %s27 = scalar_select %p24, %s25, %s26
      %p30 = pneg %p24
      %p31 = scmp.eq.s32.totalorder %s15, 1
      %p32 = por %p30, %p31
      %p33 = scmp.ne.s32.totalorder %s25, %s28
      %p34 = scmp.eq.s32.totalorder %s15, 0
      %p35 = por %p33, %p34
      %p36 = scmp.ne.s32.totalorder %s25, %s28
      %p37 = scmp.eq.s32.totalorder %s20, 1
      %p38 = por %p36, %p37
      %p39 = scmp.ne.s32.totalorder %s28, %s29
      %p40 = scmp.eq.s32.totalorder %s20, 0
      %p41 = por %p39, %p40
      %p42 = scmp.ne.s32.totalorder %s28, %s29
      %p43 = scmp.eq.s32.totalorder %s21, 1
      %p44 = por %p42, %p43
      %p46 = scmp.ne.s32.totalorder %s29, %s45
      %p47 = scmp.eq.s32.totalorder %s21, 0
      %p48 = por %p46, %p47
      %s50 = sadd.s32 %s49, 1
      %p53 = scmp.eq.s32.totalorder %s15, 1
      %p54 = scmp.ne.s32.totalorder %s49, %s51
      %p55 = scmp.eq.s32.totalorder %s15, 0
      %p56 = por %p54, %p55
      %p57 = scmp.ne.s32.totalorder %s49, %s51
      %p58 = scmp.eq.s32.totalorder %s20, 1
      %p59 = por %p57, %p58
      %p60 = scmp.ne.s32.totalorder %s51, %s52
      %p61 = scmp.eq.s32.totalorder %s20, 0
      %p62 = por %p60, %p61
      %p63 = scmp.ne.s32.totalorder %s51, %s52
      %p64 = scmp.eq.s32.totalorder %s21, 1
      %p65 = por %p63, %p64
      %p67 = scmp.ne.s32.totalorder %s52, %s66
      %p68 = scmp.eq.s32.totalorder %s21, 0
      %p69 = por %p67, %p68
      %s71 = sadd.s32 %s70, 1
      %p74 = scmp.eq.s32.totalorder %s15, 1
      %p75 = scmp.ne.s32.totalorder %s70, %s72
      %p76 = scmp.eq.s32.totalorder %s15, 0
      %p77 = por %p75, %p76
      %p78 = scmp.ne.s32.totalorder %s70, %s72
      %p79 = scmp.eq.s32.totalorder %s20, 1
      %p80 = por %p78, %p79
      %p81 = scmp.ne.s32.totalorder %s72, %s73
      %p82 = scmp.eq.s32.totalorder %s20, 0
      %p83 = por %p81, %p82
      %p84 = scmp.ne.s32.totalorder %s72, %s73
      %p85 = scmp.eq.s32.totalorder %s21, 1
      %p86 = por %p84, %p85
      %p88 = scmp.ne.s32.totalorder %s73, %s87
      %p89 = scmp.eq.s32.totalorder %s21, 0
      %p90 = por %p88, %p89
      %s92 = sadd.s32 %s91, 1
      %p95 = scmp.eq.s32.totalorder %s15, 1
      %p96 = scmp.ne.s32.totalorder %s91, %s93
      %p97 = scmp.eq.s32.totalorder %s15, 0
      %p98 = por %p96, %p97
      %p99 = scmp.ne.s32.totalorder %s91, %s93
      %p100 = scmp.eq.s32.totalorder %s20, 1
      %p101 = por %p99, %p100
      %p102 = scmp.ne.s32.totalorder %s93, %s94
      %p103 = scmp.eq.s32.totalorder %s20, 0
      %p104 = por %p102, %p103
      %p105 = scmp.ne.s32.totalorder %s93, %s94
      %p106 = scmp.eq.s32.totalorder %s21, 1
      %p107 = por %p105, %p106
      %p109 = scmp.ne.s32.totalorder %s94, %s108
      %p110 = scmp.eq.s32.totalorder %s21, 0
      %p111 = por %p109, %p110
      %s113 = sadd.s32 %s112, 1
      %p116 = scmp.eq.s32.totalorder %s15, 1
      %p117 = scmp.ne.s32.totalorder %s112, %s114
      %p118 = scmp.eq.s32.totalorder %s15, 0
      %p119 = por %p117, %p118
      %p120 = scmp.ne.s32.totalorder %s112, %s114
      %p121 = scmp.eq.s32.totalorder %s20, 1
      %p122 = por %p120, %p121
      %p123 = scmp.ne.s32.totalorder %s114, %s115
      %p124 = scmp.eq.s32.totalorder %s20, 0
      %p125 = por %p123, %p124
      %p126 = scmp.ne.s32.totalorder %s114, %s115
      %p127 = scmp.eq.s32.totalorder %s21, 1
      %p128 = por %p126, %p127
      %p130 = scmp.ne.s32.totalorder %s115, %s129
      %p131 = scmp.eq.s32.totalorder %s21, 0
      %p132 = por %p130, %p131
      %s134 = sadd.s32 %s133, 1
      %p137 = scmp.eq.s32.totalorder %s15, 1
      %p138 = scmp.ne.s32.totalorder %s133, %s135
      %p139 = scmp.eq.s32.totalorder %s15, 0
      %p140 = por %p138, %p139
      %p141 = scmp.ne.s32.totalorder %s133, %s135
      %p142 = scmp.eq.s32.totalorder %s20, 1
      %p143 = por %p141, %p142
      %p144 = scmp.ne.s32.totalorder %s135, %s136
      %p145 = scmp.eq.s32.totalorder %s20, 0
      %p146 = por %p144, %p145
      %p147 = scmp.ne.s32.totalorder %s135, %s136
      %p148 = scmp.eq.s32.totalorder %s21, 1
      %p149 = por %p147, %p148
      %p151 = scmp.ne.s32.totalorder %s136, %s150
      %p152 = scmp.eq.s32.totalorder %s21, 0
      %p153 = por %p151, %p152
      %s154 = ssub.s32 %s15, %s22
      %p155 = scmp.eq.s32.totalorder %s154, 0
      %s157 = sadd.s32 %s156, 1
      %s158 = scalar_select %p155, %s156, %s157
      %p161 = pneg %p155
      %p162 = scmp.eq.s32.totalorder %s15, 1
      %p163 = por %p161, %p162
      %p164 = scmp.ne.s32.totalorder %s156, %s159
      %p165 = scmp.eq.s32.totalorder %s15, 0
      %p166 = por %p164, %p165
      %p167 = scmp.ne.s32.totalorder %s156, %s159
      %p168 = scmp.eq.s32.totalorder %s20, 1
      %p169 = por %p167, %p168
      %p170 = scmp.ne.s32.totalorder %s159, %s160
      %p171 = scmp.eq.s32.totalorder %s20, 0
      %p172 = por %p170, %p171
      %p173 = scmp.ne.s32.totalorder %s159, %s160
      %p174 = scmp.eq.s32.totalorder %s21, 1
      %p175 = por %p173, %p174
      %p177 = scmp.ne.s32.totalorder %s160, %s176
      %p178 = scmp.eq.s32.totalorder %s21, 0
      %p179 = por %p177, %p178
      %p180 = scmp.le.s32.totalorder 1, %s15
      %p181 = scmp.lt.s32.totalorder %s15, 3
      %p182 = pnand %p180, %p181
      %p183 = pneg %p182
      // Predicated region
      $region9: #{net_nomatrix16_v2.1} parent=5 // pred_check
        _
      $region10: #{net_nomatrix16_v2.1} parent=5 // pred_check_branch
        %185 = sbr.rel (%p182) target = $region12
      $region11: #{net_nomatrix16_v2.1} parent=5 // pred_region
        %s186 = ssub.s32 %s15, 1
        // Predicated region
        $region13: #{net_nomatrix16_v2.1} parent=11 // pred_check
          %p187 = pneg %p62
        $region14: #{net_nomatrix16_v2.1} parent=11 // pred_check_branch
          %189 = sbr.rel (%p187) target = $region16
        $region15: #{net_nomatrix16_v2.1} parent=11 // pred_region
          _
        $region16: #{net_nomatrix16_v2.1} parent=11 // pred_fallthru
          _
        // Predicated region
        $region17: #{net_nomatrix16_v2.1} parent=11 // pred_check
          %p190 = pneg %p83
        $region18: #{net_nomatrix16_v2.1} parent=11 // pred_check_branch
          %192 = sbr.rel (%p190) target = $region20
        $region19: #{net_nomatrix16_v2.1} parent=11 // pred_region
          _
        $region20: #{net_nomatrix16_v2.1} parent=11 // pred_fallthru
          _
        // Predicated region
        $region21: #{net_nomatrix16_v2.1} parent=11 // pred_check
          %p193 = pneg %p104
        $region22: #{net_nomatrix16_v2.1} parent=11 // pred_check_branch
          %195 = sbr.rel (%p193) target = $region24
        $region23: #{net_nomatrix16_v2.1} parent=11 // pred_region
          _
        $region24: #{net_nomatrix16_v2.1} parent=11 // pred_fallthru
          _
        // Predicated region
        $region25: #{net_nomatrix16_v2.1} parent=11 // pred_check
          %p196 = pneg %p125
        $region26: #{net_nomatrix16_v2.1} parent=11 // pred_check_branch
          %198 = sbr.rel (%p196) target = $region28
        $region27: #{net_nomatrix16_v2.1} parent=11 // pred_region
          _
        $region28: #{net_nomatrix16_v2.1} parent=11 // pred_fallthru
          _
        // Predicated region
        $region29: #{net_nomatrix16_v2.1} parent=11 // pred_check
          %p199 = pneg %p146
        $region30: #{net_nomatrix16_v2.1} parent=11 // pred_check_branch
          %201 = sbr.rel (%p199) target = $region32
        $region31: #{net_nomatrix16_v2.1} parent=11 // pred_region
          _
        $region32: #{net_nomatrix16_v2.1} parent=11 // pred_fallthru
          _
      $region12: #{net_nomatrix16_v2.1} parent=5 // pred_fallthru
        _
      %p202 = scmp.lt.s32.totalorder %s15, 2
      // Predicated region
      $region33: #{net_nomatrix16_v2.1} parent=5 // pred_check
        %p203 = pneg %p202
      $region34: #{net_nomatrix16_v2.1} parent=5 // pred_check_branch
        %205 = sbr.rel (%p203) target = $region36
      $region35: #{net_nomatrix16_v2.1} parent=5 // pred_region
        // Predicated region
        $region37: #{net_nomatrix16_v2.1} parent=35 // pred_check
          %p206 = pneg %p35
        $region38: #{net_nomatrix16_v2.1} parent=35 // pred_check_branch
          %208 = sbr.rel (%p206) target = $region40
        $region39: #{net_nomatrix16_v2.1} parent=35 // pred_region
          %s209 = smul.u32 160, %s15
          %s210 = ssub.s32 313, %s209
          %p211 = scmp.lt.s32.totalorder %s210, 160
          %s212 = scalar_select %p211, %s210, 160
          %s213 = smul.u32 8, %s212
          %p214 = scmp.lt.s32.totalorder %s209, 312
          %s215 = scalar_select %p214, %s209, 312
          %s216 = smul.addr %s215, 8
          %s217 = scalar_lea.vmem %s0, %s216
          %s218 = smul.u32 160, %s15
          %s219 = ssub.s32 313, %s218
          %p220 = scmp.lt.s32.totalorder %s219, 160
          %s221 = scalar_select %p220, %s219, 160
          %s222 = smul.u32 8, %s221
        $region40: #{net_nomatrix16_v2.1} parent=35 // pred_fallthru
          _
      $region36: #{net_nomatrix16_v2.1} parent=5 // pred_fallthru
        _
      %p223 = scmp.le.s32.totalorder 1, %s15
      %p224 = scmp.lt.s32.totalorder %s15, 3
      %p225 = pnand %p223, %p224
      %p226 = pneg %p225
      // Predicated region
      $region41: #{net_nomatrix16_v2.1} parent=5 // pred_check
        _
      $region42: #{net_nomatrix16_v2.1} parent=5 // pred_check_branch
        %228 = sbr.rel (%p225) target = $region44
      $region43: #{net_nomatrix16_v2.1} parent=5 // pred_region
        %s229 = ssub.s32 %s15, 1
        %s230 = smul.u32 160, %s20
        %s231 = ssub.s32 313, %s230
        %p232 = scmp.lt.s32.totalorder %s231, 160
        %s233 = scalar_select %p232, %s231, 160
        %s234 = smul.u32 8, %s233
        %p235 = scmp.lt.s32.totalorder %s230, 312
        %s236 = scalar_select %p235, %s230, 312
        %s237 = smul.addr %s236, 8
        %s238 = scalar_lea.vmem %s0, %s237
        %p239 = pneg %p41
        %p240 = pneg %p38
        %p241 = pneg %p62
        %p242 = pneg %p59
        %p243 = pneg %p83
        %p244 = pneg %p80
        %p245 = pneg %p104
        %p246 = pneg %p101
        %p247 = pneg %p125
        %p248 = pneg %p122
        %p249 = pneg %p146
        %p250 = pneg %p143
        %p251 = pneg %p172
        %p252 = pneg %p169
        %s253 = sand.u32 %s159, 1
        %s254 = scalar_lea.sflag [#allocation3], %s253
        %s255 = sand.u32 %s159, 1
        %s256 = smul.addr %s255, 80
        %s257 = scalar_lea.vmem [#allocation2], %s256
        %s258 = smul.u32 160, %s20
        %s259 = ssub.s32 313, %s258
        %p260 = scmp.lt.s32.totalorder %s259, 160
        %s261 = scalar_select %p260, %s259, 160
        %s262 = smul.u32 8, %s261
        %p263 = scmp.lt.s32.totalorder %s258, 312
        %s264 = scalar_select %p263, %s258, 312
        %s265 = smul.addr %s264, 8
        %s266 = scalar_lea.vmem %s0, %s265
        %s267 = smul.u32 160, %s20
        %s268 = ssub.s32 313, %s267
        %p269 = scmp.lt.s32.totalorder %s268, 160
        %s270 = scalar_select %p269, %s268, 160
        %s271 = smul.u32 8, %s270
        %s272 = smul.u32 10, %s20
        %v273 = vld [vmem:[%s1] sm:$0xff]
        %v274 = vld [vmem:[%s1 + $0x8] sm:$0xff]
        %v275 = vld [vmem:[%s266] sm:$0xff]
        %v276 = vld [vmem:[%s266 + $0x8] sm:$0xff]
        %v277 = vld [vmem:[%s266 + $0x10] sm:$0xff]
        %v278 = vld [vmem:[%s266 + $0x18] sm:$0xff]
        %v279 = vld [vmem:[%s266 + $0x20] sm:$0xff]
        %v280 = vld [vmem:[%s266 + $0x28] sm:$0xff]
        %v281 = vld [vmem:[%s266 + $0x30] sm:$0xff]
        %v282 = vld [vmem:[%s266 + $0x38] sm:$0xff]
        %v283 = vld [vmem:[%s266 + $0x40] sm:$0xff]
        %v284 = vld [vmem:[%s266 + $0x48] sm:$0xff]
        %v285 = vld [vmem:[%s266 + $0x50] sm:$0xff]
        %v286 = vld [vmem:[%s266 + $0x58] sm:$0xff]
        %v287 = vld [vmem:[%s266 + $0x60] sm:$0xff]
        %v288 = vld [vmem:[%s266 + $0x68] sm:$0xff]
        %v289 = vld [vmem:[%s266 + $0x70] sm:$0xff]
        %v290 = vld [vmem:[%s266 + $0x78] sm:$0xff]
        %v291 = vld [vmem:[%s266 + $0x80] sm:$0xff]
        %v292 = vld [vmem:[%s266 + $0x88] sm:$0xff]
        %v293 = vld [vmem:[%s266 + $0x90] sm:$0xff]
        %v294 = vld [vmem:[%s266 + $0x98] sm:$0xff]
        %v295 = vld [vmem:[%s266 + $0xa0] sm:$0xff]
        %v296 = vld [vmem:[%s266 + $0xa8] sm:$0xff]
        %v297 = vld [vmem:[%s266 + $0xb0] sm:$0xff]
        %v298 = vld [vmem:[%s266 + $0xb8] sm:$0xff]
        %v299 = vld [vmem:[%s266 + $0xc0] sm:$0xff]
        %v300 = vld [vmem:[%s266 + $0xc8] sm:$0xff]
        %v301 = vld [vmem:[%s266 + $0xd0] sm:$0xff]
        %v302 = vld [vmem:[%s266 + $0xd8] sm:$0xff]
        %v303 = vld [vmem:[%s266 + $0xe0] sm:$0xff]
        %v304 = vld [vmem:[%s266 + $0xe8] sm:$0xff]
        %v305 = vld [vmem:[%s266 + $0xf0] sm:$0xff]
        %v306 = vld [vmem:[%s266 + $0xf8] sm:$0xff]
        %v307 = vld [vmem:[%s266 + $0x100] sm:$0xff]
        %v308 = vld [vmem:[%s266 + $0x108] sm:$0xff]
        %v309 = vld [vmem:[%s266 + $0x110] sm:$0xff]
        %v310 = vld [vmem:[%s266 + $0x118] sm:$0xff]
        %v311 = vld [vmem:[%s266 + $0x120] sm:$0xff]
        %v312 = vld [vmem:[%s266 + $0x128] sm:$0xff]
        %v313 = vld [vmem:[%s266 + $0x130] sm:$0xff]
        %v314 = vld [vmem:[%s266 + $0x138] sm:$0xff]
        %v315 = vld [vmem:[%s266 + $0x140] sm:$0xff]
        %v316 = vld [vmem:[%s266 + $0x148] sm:$0xff]
        %v317 = vld [vmem:[%s266 + $0x150] sm:$0xff]
        %v318 = vld [vmem:[%s266 + $0x158] sm:$0xff]
        %v319 = vld [vmem:[%s266 + $0x160] sm:$0xff]
        %v320 = vld [vmem:[%s266 + $0x168] sm:$0xff]
        %v321 = vld [vmem:[%s266 + $0x170] sm:$0xff]
        %v322 = vld [vmem:[%s266 + $0x178] sm:$0xff]
        %v323 = vld [vmem:[%s266 + $0x180] sm:$0xff]
        %v324 = vld [vmem:[%s266 + $0x188] sm:$0xff]
        %v325 = vld [vmem:[%s266 + $0x190] sm:$0xff]
        %v326 = vld [vmem:[%s266 + $0x198] sm:$0xff]
        %v327 = vld [vmem:[%s266 + $0x1a0] sm:$0xff]
        %v328 = vld [vmem:[%s266 + $0x1a8] sm:$0xff]
        %v329 = vld [vmem:[%s266 + $0x1b0] sm:$0xff]
        %v330 = vld [vmem:[%s266 + $0x1b8] sm:$0xff]
        %v331 = vld [vmem:[%s266 + $0x1c0] sm:$0xff]
        %v332 = vld [vmem:[%s266 + $0x1c8] sm:$0xff]
        %v333 = vld [vmem:[%s266 + $0x1d0] sm:$0xff]
        %v334 = vld [vmem:[%s266 + $0x1d8] sm:$0xff]
        %v335 = vld [vmem:[%s266 + $0x1e0] sm:$0xff]
        %v336 = vld [vmem:[%s266 + $0x1e8] sm:$0xff]
        %v337 = vld [vmem:[%s266 + $0x1f0] sm:$0xff]
        %v338 = vld [vmem:[%s266 + $0x1f8] sm:$0xff]
        %v339 = vld [vmem:[%s266 + $0x200] sm:$0xff]
        %v340 = vld [vmem:[%s266 + $0x208] sm:$0xff]
        %v341 = vld [vmem:[%s266 + $0x210] sm:$0xff]
        %v342 = vld [vmem:[%s266 + $0x218] sm:$0xff]
        %v343 = vld [vmem:[%s266 + $0x220] sm:$0xff]
        %v344 = vld [vmem:[%s266 + $0x228] sm:$0xff]
        %v345 = vld [vmem:[%s266 + $0x230] sm:$0xff]
        %v346 = vld [vmem:[%s266 + $0x238] sm:$0xff]
        %v347 = vld [vmem:[%s266 + $0x240] sm:$0xff]
        %v348 = vld [vmem:[%s266 + $0x248] sm:$0xff]
        %v349 = vld [vmem:[%s266 + $0x250] sm:$0xff]
        %v350 = vld [vmem:[%s266 + $0x258] sm:$0xff]
        %v351 = vld [vmem:[%s266 + $0x260] sm:$0xff]
        %v352 = vld [vmem:[%s266 + $0x268] sm:$0xff]
        %v353 = vld [vmem:[%s266 + $0x270] sm:$0xff]
        %v354 = vld [vmem:[%s266 + $0x278] sm:$0xff]
        %v355 = vld [vmem:[%s266 + $0x280] sm:$0xff]
        %v356 = vld [vmem:[%s266 + $0x288] sm:$0xff]
        %v357 = vld [vmem:[%s266 + $0x290] sm:$0xff]
        %v358 = vld [vmem:[%s266 + $0x298] sm:$0xff]
        %v359 = vld [vmem:[%s266 + $0x2a0] sm:$0xff]
        %v360 = vld [vmem:[%s266 + $0x2a8] sm:$0xff]
        %v361 = vld [vmem:[%s266 + $0x2b0] sm:$0xff]
        %v362 = vld [vmem:[%s266 + $0x2b8] sm:$0xff]
        %v363 = vld [vmem:[%s266 + $0x2c0] sm:$0xff]
        %v364 = vld [vmem:[%s266 + $0x2c8] sm:$0xff]
        %v365 = vld [vmem:[%s266 + $0x2d0] sm:$0xff]
        %v366 = vld [vmem:[%s266 + $0x2d8] sm:$0xff]
        %v367 = vld [vmem:[%s266 + $0x2e0] sm:$0xff]
        %v368 = vld [vmem:[%s266 + $0x2e8] sm:$0xff]
        %v369 = vld [vmem:[%s266 + $0x2f0] sm:$0xff]
        %v370 = vld [vmem:[%s266 + $0x2f8] sm:$0xff]
        %v371 = vld [vmem:[%s266 + $0x300] sm:$0xff]
        %v372 = vld [vmem:[%s266 + $0x308] sm:$0xff]
        %v373 = vld [vmem:[%s266 + $0x310] sm:$0xff]
        %v374 = vld [vmem:[%s266 + $0x318] sm:$0xff]
        %v375 = vld [vmem:[%s266 + $0x320] sm:$0xff]
        %v376 = vld [vmem:[%s266 + $0x328] sm:$0xff]
        %v377 = vld [vmem:[%s266 + $0x330] sm:$0xff]
        %v378 = vld [vmem:[%s266 + $0x338] sm:$0xff]
        %v379 = vld [vmem:[%s266 + $0x340] sm:$0xff]
        %v380 = vld [vmem:[%s266 + $0x348] sm:$0xff]
        %v381 = vld [vmem:[%s266 + $0x350] sm:$0xff]
        %v382 = vld [vmem:[%s266 + $0x358] sm:$0xff]
        %v383 = vld [vmem:[%s266 + $0x360] sm:$0xff]
        %v384 = vld [vmem:[%s266 + $0x368] sm:$0xff]
        %v385 = vld [vmem:[%s266 + $0x370] sm:$0xff]
        %v386 = vld [vmem:[%s266 + $0x378] sm:$0xff]
        %v387 = vld [vmem:[%s266 + $0x380] sm:$0xff]
        %v388 = vld [vmem:[%s266 + $0x388] sm:$0xff]
        %v389 = vld [vmem:[%s266 + $0x390] sm:$0xff]
        %v390 = vld [vmem:[%s266 + $0x398] sm:$0xff]
        %v391 = vld [vmem:[%s266 + $0x3a0] sm:$0xff]
        %v392 = vld [vmem:[%s266 + $0x3a8] sm:$0xff]
        %v393 = vld [vmem:[%s266 + $0x3b0] sm:$0xff]
        %v394 = vld [vmem:[%s266 + $0x3b8] sm:$0xff]
        %v395 = vld [vmem:[%s266 + $0x3c0] sm:$0xff]
        %v396 = vld [vmem:[%s266 + $0x3c8] sm:$0xff]
        %v397 = vld [vmem:[%s266 + $0x3d0] sm:$0xff]
        %v398 = vld [vmem:[%s266 + $0x3d8] sm:$0xff]
        %v399 = vld [vmem:[%s266 + $0x3e0] sm:$0xff]
        %v400 = vld [vmem:[%s266 + $0x3e8] sm:$0xff]
        %v401 = vld [vmem:[%s266 + $0x3f0] sm:$0xff]
        %v402 = vld [vmem:[%s266 + $0x3f8] sm:$0xff]
        %v403 = vld [vmem:[%s266 + $0x400] sm:$0xff]
        %v404 = vld [vmem:[%s266 + $0x408] sm:$0xff]
        %v405 = vld [vmem:[%s266 + $0x410] sm:$0xff]
        %v406 = vld [vmem:[%s266 + $0x418] sm:$0xff]
        %v407 = vld [vmem:[%s266 + $0x420] sm:$0xff]
        %v408 = vld [vmem:[%s266 + $0x428] sm:$0xff]
        %v409 = vld [vmem:[%s266 + $0x430] sm:$0xff]
        %v410 = vld [vmem:[%s266 + $0x438] sm:$0xff]
        %v411 = vld [vmem:[%s266 + $0x440] sm:$0xff]
        %v412 = vld [vmem:[%s266 + $0x448] sm:$0xff]
        %v413 = vld [vmem:[%s266 + $0x450] sm:$0xff]
        %v414 = vld [vmem:[%s266 + $0x458] sm:$0xff]
        %v415 = vld [vmem:[%s266 + $0x460] sm:$0xff]
        %v416 = vld [vmem:[%s266 + $0x468] sm:$0xff]
        %v417 = vld [vmem:[%s266 + $0x470] sm:$0xff]
        %v418 = vld [vmem:[%s266 + $0x478] sm:$0xff]
        %v419 = vld [vmem:[%s266 + $0x480] sm:$0xff]
        %v420 = vld [vmem:[%s266 + $0x488] sm:$0xff]
        %v421 = vld [vmem:[%s266 + $0x490] sm:$0xff]
        %v422 = vld [vmem:[%s266 + $0x498] sm:$0xff]
        %v423 = vld [vmem:[%s266 + $0x4a0] sm:$0xff]
        %v424 = vld [vmem:[%s266 + $0x4a8] sm:$0xff]
        %v425 = vld [vmem:[%s266 + $0x4b0] sm:$0xff]
        %v426 = vld [vmem:[%s266 + $0x4b8] sm:$0xff]
        %v427 = vld [vmem:[%s266 + $0x4c0] sm:$0xff]
        %v428 = vld [vmem:[%s266 + $0x4c8] sm:$0xff]
        %v429 = vld [vmem:[%s266 + $0x4d0] sm:$0xff]
        %v430 = vld [vmem:[%s266 + $0x4d8] sm:$0xff]
        %v431 = vld [vmem:[%s266 + $0x4e0] sm:$0xff]
        %v432 = vld [vmem:[%s266 + $0x4e8] sm:$0xff]
        %v433 = vld [vmem:[%s266 + $0x4f0] sm:$0xff]
        %v434 = vld [vmem:[%s266 + $0x4f8] sm:$0xff]
        %v435 = vld [vmem:[%s3] sm:$0xff]
        %v436 = vld [vmem:[%s3 + $0x8] sm:$0xff]
        %438 = vset.pattern.permute.xlu0 0
        %439 = vperm.xlu0 %438, %v435
        %v440 = vpop.permute.xlu0 %439
        %443 = vset.pattern.permute.xlu0 0
        %444 = vperm.xlu0 %443, %v436
        %v445 = vpop.permute.xlu0 %444
        %vm447 = vcmask 121856
        %v449 = vsel %vm447, %v273, 0
        %v452 = vsel %vm447, %v274, 0
        %v455 = vsel %vm447, %v275, 0
        %v458 = vsel %vm447, %v276, 0
        %v461 = vsel %vm447, %v277, 0
        %v464 = vsel %vm447, %v278, 0
        %v467 = vsel %vm447, %v279, 0
        %v470 = vsel %vm447, %v280, 0
        %v473 = vsel %vm447, %v281, 0
        %v476 = vsel %vm447, %v282, 0
        %v479 = vsel %vm447, %v283, 0
        %v482 = vsel %vm447, %v284, 0
        %v485 = vsel %vm447, %v285, 0
        %v488 = vsel %vm447, %v286, 0
        %v491 = vsel %vm447, %v287, 0
        %v494 = vsel %vm447, %v288, 0
        %v497 = vsel %vm447, %v289, 0
        %v500 = vsel %vm447, %v290, 0
        %v503 = vsel %vm447, %v291, 0
        %v506 = vsel %vm447, %v292, 0
        %v509 = vsel %vm447, %v293, 0
        %v512 = vsel %vm447, %v294, 0
        %v515 = vsel %vm447, %v295, 0
        %v518 = vsel %vm447, %v296, 0
        %v521 = vsel %vm447, %v297, 0
        %v524 = vsel %vm447, %v298, 0
        %v527 = vsel %vm447, %v299, 0
        %v530 = vsel %vm447, %v300, 0
        %v533 = vsel %vm447, %v301, 0
        %v536 = vsel %vm447, %v302, 0
        %v539 = vsel %vm447, %v303, 0
        %v542 = vsel %vm447, %v304, 0
        %v545 = vsel %vm447, %v305, 0
        %v548 = vsel %vm447, %v306, 0
        %v551 = vsel %vm447, %v307, 0
        %v554 = vsel %vm447, %v308, 0
        %v557 = vsel %vm447, %v309, 0
        %v560 = vsel %vm447, %v310, 0
        %v563 = vsel %vm447, %v311, 0
        %v566 = vsel %vm447, %v312, 0
        %v569 = vsel %vm447, %v313, 0
        %v572 = vsel %vm447, %v314, 0
        %v575 = vsel %vm447, %v315, 0
        %v578 = vsel %vm447, %v316, 0
        %v581 = vsel %vm447, %v317, 0
        %v584 = vsel %vm447, %v318, 0
        %v587 = vsel %vm447, %v319, 0
        %v590 = vsel %vm447, %v320, 0
        %v593 = vsel %vm447, %v321, 0
        %v596 = vsel %vm447, %v322, 0
        %v599 = vsel %vm447, %v323, 0
        %v602 = vsel %vm447, %v324, 0
        %v605 = vsel %vm447, %v325, 0
        %v608 = vsel %vm447, %v326, 0
        %v611 = vsel %vm447, %v327, 0
        %v614 = vsel %vm447, %v328, 0
        %v617 = vsel %vm447, %v329, 0
        %v620 = vsel %vm447, %v330, 0
        %v623 = vsel %vm447, %v331, 0
        %v626 = vsel %vm447, %v332, 0
        %v629 = vsel %vm447, %v333, 0
        %v632 = vsel %vm447, %v334, 0
        %v635 = vsel %vm447, %v335, 0
        %v638 = vsel %vm447, %v336, 0
        %v641 = vsel %vm447, %v337, 0
        %v644 = vsel %vm447, %v338, 0
        %v647 = vsel %vm447, %v339, 0
        %v650 = vsel %vm447, %v340, 0
        %v653 = vsel %vm447, %v341, 0
        %v656 = vsel %vm447, %v342, 0
        %v659 = vsel %vm447, %v343, 0
        %v662 = vsel %vm447, %v344, 0
        %v665 = vsel %vm447, %v345, 0
        %v668 = vsel %vm447, %v346, 0
        %v671 = vsel %vm447, %v347, 0
        %v674 = vsel %vm447, %v348, 0
        %v677 = vsel %vm447, %v349, 0
        %v680 = vsel %vm447, %v350, 0
        %v683 = vsel %vm447, %v351, 0
        %v686 = vsel %vm447, %v352, 0
        %v689 = vsel %vm447, %v353, 0
        %v692 = vsel %vm447, %v354, 0
        %v695 = vsel %vm447, %v355, 0
        %v698 = vsel %vm447, %v356, 0
        %v701 = vsel %vm447, %v357, 0
        %v704 = vsel %vm447, %v358, 0
        %v707 = vsel %vm447, %v359, 0
        %v710 = vsel %vm447, %v360, 0
        %v713 = vsel %vm447, %v361, 0
        %v716 = vsel %vm447, %v362, 0
        %v719 = vsel %vm447, %v363, 0
        %v722 = vsel %vm447, %v364, 0
        %v725 = vsel %vm447, %v365, 0
        %v728 = vsel %vm447, %v366, 0
        %v731 = vsel %vm447, %v367, 0
        %v734 = vsel %vm447, %v368, 0
        %v737 = vsel %vm447, %v369, 0
        %v740 = vsel %vm447, %v370, 0
        %v743 = vsel %vm447, %v371, 0
        %v746 = vsel %vm447, %v372, 0
        %v749 = vsel %vm447, %v373, 0
        %v752 = vsel %vm447, %v374, 0
        %v755 = vsel %vm447, %v375, 0
        %v758 = vsel %vm447, %v376, 0
        %v761 = vsel %vm447, %v377, 0
        %v764 = vsel %vm447, %v378, 0
        %v767 = vsel %vm447, %v379, 0
        %v770 = vsel %vm447, %v380, 0
        %v773 = vsel %vm447, %v381, 0
        %v776 = vsel %vm447, %v382, 0
        %v779 = vsel %vm447, %v383, 0
        %v782 = vsel %vm447, %v384, 0
        %v785 = vsel %vm447, %v385, 0
        %v788 = vsel %vm447, %v386, 0
        %v791 = vsel %vm447, %v387, 0
        %v794 = vsel %vm447, %v388, 0
        %v797 = vsel %vm447, %v389, 0
        %v800 = vsel %vm447, %v390, 0
        %v803 = vsel %vm447, %v391, 0
        %v806 = vsel %vm447, %v392, 0
        %v809 = vsel %vm447, %v393, 0
        %v812 = vsel %vm447, %v394, 0
        %v815 = vsel %vm447, %v395, 0
        %v818 = vsel %vm447, %v396, 0
        %v821 = vsel %vm447, %v397, 0
        %v824 = vsel %vm447, %v398, 0
        %v827 = vsel %vm447, %v399, 0
        %v830 = vsel %vm447, %v400, 0
        %v833 = vsel %vm447, %v401, 0
        %v836 = vsel %vm447, %v402, 0
        %v839 = vsel %vm447, %v403, 0
        %v842 = vsel %vm447, %v404, 0
        %v845 = vsel %vm447, %v405, 0
        %v848 = vsel %vm447, %v406, 0
        %v851 = vsel %vm447, %v407, 0
        %v854 = vsel %vm447, %v408, 0
        %v857 = vsel %vm447, %v409, 0
        %v860 = vsel %vm447, %v410, 0
        %v863 = vsel %vm447, %v411, 0
        %v866 = vsel %vm447, %v412, 0
        %v869 = vsel %vm447, %v413, 0
        %v872 = vsel %vm447, %v414, 0
        %v875 = vsel %vm447, %v415, 0
        %v878 = vsel %vm447, %v416, 0
        %v881 = vsel %vm447, %v417, 0
        %v884 = vsel %vm447, %v418, 0
        %v887 = vsel %vm447, %v419, 0
        %v890 = vsel %vm447, %v420, 0
        %v893 = vsel %vm447, %v421, 0
        %v896 = vsel %vm447, %v422, 0
        %v899 = vsel %vm447, %v423, 0
        %v902 = vsel %vm447, %v424, 0
        %v905 = vsel %vm447, %v425, 0
        %v908 = vsel %vm447, %v426, 0
        %v911 = vsel %vm447, %v427, 0
        %v914 = vsel %vm447, %v428, 0
        %v917 = vsel %vm447, %v429, 0
        %v920 = vsel %vm447, %v430, 0
        %v923 = vsel %vm447, %v431, 0
        %v926 = vsel %vm447, %v432, 0
        %v929 = vsel %vm447, %v433, 0
        %v932 = vsel %vm447, %v434, 0
        %934 = vmatpush.xpose.msra.mxu0 %v500
        %935 = vmatpush.xpose.msra.mxu0 %v497
        %936 = vmatpush.xpose.msra.mxu0 %v494
        %937 = vmatpush.xpose.msra.mxu0 %v491
        %938 = vmatpush.xpose.msra.mxu0 %v488
        %939 = vmatpush.xpose.msra.mxu0 %v485
        %940 = vmatpush.xpose.msra.mxu0 %v482
        %941 = vmatpush.xpose.msra.mxu0 %v479
        %942 = vmatpush.xpose.msra.mxu0 %v476
        %943 = vmatpush.xpose.msra.mxu0 %v473
        %944 = vmatpush.xpose.msra.mxu0 %v470
        %945 = vmatpush.xpose.msra.mxu0 %v467
        %946 = vmatpush.xpose.msra.mxu0 %v464
        %947 = vmatpush.xpose.msra.mxu0 %v461
        %948 = vmatpush.xpose.msra.mxu0 %v458
        %949 = vmatpush.xpose.msra.mxu0 %v455
        %950 = vmatmul.f32.gmra.mxu0 %v449
        %v951 = vpop.f32.mrf.mxu0
        %v952 = vadd.f32 %v440, %v951
        %953 = vmatmul.f32.gmra.mxu0 %v452
        %v954 = vpop.f32.mrf.mxu0
        %v955 = vadd.f32 %v445, %v954
        %956 = vdwg.mxu0
        %957 = vmatpush.xpose.msra.mxu0 %v548
        %958 = vmatpush.xpose.msra.mxu0 %v545
        %959 = vmatpush.xpose.msra.mxu0 %v542
        %960 = vmatpush.xpose.msra.mxu0 %v539
        %961 = vmatpush.xpose.msra.mxu0 %v536
        %962 = vmatpush.xpose.msra.mxu0 %v533
        %963 = vmatpush.xpose.msra.mxu0 %v530
        %964 = vmatpush.xpose.msra.mxu0 %v527
        %965 = vmatpush.xpose.msra.mxu0 %v524
        %966 = vmatpush.xpose.msra.mxu0 %v521
        %967 = vmatpush.xpose.msra.mxu0 %v518
        %968 = vmatpush.xpose.msra.mxu0 %v515
        %969 = vmatpush.xpose.msra.mxu0 %v512
        %970 = vmatpush.xpose.msra.mxu0 %v509
        %971 = vmatpush.xpose.msra.mxu0 %v506
        %972 = vmatpush.xpose.msra.mxu0 %v503
        %973 = vmatmul.f32.gmra.mxu0 %v449
        %v974 = vpop.f32.mrf.mxu0
        %v975 = vadd.f32 %v440, %v974
        %976 = vmatmul.f32.gmra.mxu0 %v452
        %v977 = vpop.f32.mrf.mxu0
        %v978 = vadd.f32 %v445, %v977
        %979 = vdwg.mxu0
        %980 = vmatpush.xpose.msra.mxu0 %v596
        %981 = vmatpush.xpose.msra.mxu0 %v593
        %982 = vmatpush.xpose.msra.mxu0 %v590
        %983 = vmatpush.xpose.msra.mxu0 %v587
        %984 = vmatpush.xpose.msra.mxu0 %v584
        %985 = vmatpush.xpose.msra.mxu0 %v581
        %986 = vmatpush.xpose.msra.mxu0 %v578
        %987 = vmatpush.xpose.msra.mxu0 %v575
        %988 = vmatpush.xpose.msra.mxu0 %v572
        %989 = vmatpush.xpose.msra.mxu0 %v569
        %990 = vmatpush.xpose.msra.mxu0 %v566
        %991 = vmatpush.xpose.msra.mxu0 %v563
        %992 = vmatpush.xpose.msra.mxu0 %v560
        %993 = vmatpush.xpose.msra.mxu0 %v557
        %994 = vmatpush.xpose.msra.mxu0 %v554
        %995 = vmatpush.xpose.msra.mxu0 %v551
        %996 = vmatmul.f32.gmra.mxu0 %v449
        %v997 = vpop.f32.mrf.mxu0
        %v998 = vadd.f32 %v440, %v997
        %999 = vmatmul.f32.gmra.mxu0 %v452
        %v1000 = vpop.f32.mrf.mxu0
        %v1001 = vadd.f32 %v445, %v1000
        %1002 = vdwg.mxu0
        %1003 = vmatpush.xpose.msra.mxu0 %v644
        %1004 = vmatpush.xpose.msra.mxu0 %v641
        %1005 = vmatpush.xpose.msra.mxu0 %v638
        %1006 = vmatpush.xpose.msra.mxu0 %v635
        %1007 = vmatpush.xpose.msra.mxu0 %v632
        %1008 = vmatpush.xpose.msra.mxu0 %v629
        %1009 = vmatpush.xpose.msra.mxu0 %v626
        %1010 = vmatpush.xpose.msra.mxu0 %v623
        %1011 = vmatpush.xpose.msra.mxu0 %v620
        %1012 = vmatpush.xpose.msra.mxu0 %v617
        %1013 = vmatpush.xpose.msra.mxu0 %v614
        %1014 = vmatpush.xpose.msra.mxu0 %v611
        %1015 = vmatpush.xpose.msra.mxu0 %v608
        %1016 = vmatpush.xpose.msra.mxu0 %v605
        %1017 = vmatpush.xpose.msra.mxu0 %v602
        %1018 = vmatpush.xpose.msra.mxu0 %v599
        %1019 = vmatmul.f32.gmra.mxu0 %v449
        %v1020 = vpop.f32.mrf.mxu0
        %v1021 = vadd.f32 %v440, %v1020
        %1022 = vmatmul.f32.gmra.mxu0 %v452
        %v1023 = vpop.f32.mrf.mxu0
        %v1024 = vadd.f32 %v445, %v1023
        %1025 = vdwg.mxu0
        %1026 = vmatpush.xpose.msra.mxu0 %v692
        %1027 = vmatpush.xpose.msra.mxu0 %v689
        %1028 = vmatpush.xpose.msra.mxu0 %v686
        %1029 = vmatpush.xpose.msra.mxu0 %v683
        %1030 = vmatpush.xpose.msra.mxu0 %v680
        %1031 = vmatpush.xpose.msra.mxu0 %v677
        %1032 = vmatpush.xpose.msra.mxu0 %v674
        %1033 = vmatpush.xpose.msra.mxu0 %v671
        %1034 = vmatpush.xpose.msra.mxu0 %v668
        %1035 = vmatpush.xpose.msra.mxu0 %v665
        %1036 = vmatpush.xpose.msra.mxu0 %v662
        %1037 = vmatpush.xpose.msra.mxu0 %v659
        %1038 = vmatpush.xpose.msra.mxu0 %v656
        %1039 = vmatpush.xpose.msra.mxu0 %v653
        %1040 = vmatpush.xpose.msra.mxu0 %v650
        %1041 = vmatpush.xpose.msra.mxu0 %v647
        %1042 = vmatmul.f32.gmra.mxu0 %v449
        %v1043 = vpop.f32.mrf.mxu0
        %v1044 = vadd.f32 %v440, %v1043
        %1045 = vmatmul.f32.gmra.mxu0 %v452
        %v1046 = vpop.f32.mrf.mxu0
        %v1047 = vadd.f32 %v445, %v1046
        %1048 = vdwg.mxu0
        %1049 = vmatpush.xpose.msra.mxu0 %v740
        %1050 = vmatpush.xpose.msra.mxu0 %v737
        %1051 = vmatpush.xpose.msra.mxu0 %v734
        %1052 = vmatpush.xpose.msra.mxu0 %v731
        %1053 = vmatpush.xpose.msra.mxu0 %v728
        %1054 = vmatpush.xpose.msra.mxu0 %v725
        %1055 = vmatpush.xpose.msra.mxu0 %v722
        %1056 = vmatpush.xpose.msra.mxu0 %v719
        %1057 = vmatpush.xpose.msra.mxu0 %v716
        %1058 = vmatpush.xpose.msra.mxu0 %v713
        %1059 = vmatpush.xpose.msra.mxu0 %v710
        %1060 = vmatpush.xpose.msra.mxu0 %v707
        %1061 = vmatpush.xpose.msra.mxu0 %v704
        %1062 = vmatpush.xpose.msra.mxu0 %v701
        %1063 = vmatpush.xpose.msra.mxu0 %v698
        %1064 = vmatpush.xpose.msra.mxu0 %v695
        %1065 = vmatmul.f32.gmra.mxu0 %v449
        %v1066 = vpop.f32.mrf.mxu0
        %v1067 = vadd.f32 %v440, %v1066
        %1068 = vmatmul.f32.gmra.mxu0 %v452
        %v1069 = vpop.f32.mrf.mxu0
        %v1070 = vadd.f32 %v445, %v1069
        %1071 = vdwg.mxu0
        %1072 = vmatpush.xpose.msra.mxu0 %v788
        %1073 = vmatpush.xpose.msra.mxu0 %v785
        %1074 = vmatpush.xpose.msra.mxu0 %v782
        %1075 = vmatpush.xpose.msra.mxu0 %v779
        %1076 = vmatpush.xpose.msra.mxu0 %v776
        %1077 = vmatpush.xpose.msra.mxu0 %v773
        %1078 = vmatpush.xpose.msra.mxu0 %v770
        %1079 = vmatpush.xpose.msra.mxu0 %v767
        %1080 = vmatpush.xpose.msra.mxu0 %v764
        %1081 = vmatpush.xpose.msra.mxu0 %v761
        %1082 = vmatpush.xpose.msra.mxu0 %v758
        %1083 = vmatpush.xpose.msra.mxu0 %v755
        %1084 = vmatpush.xpose.msra.mxu0 %v752
        %1085 = vmatpush.xpose.msra.mxu0 %v749
        %1086 = vmatpush.xpose.msra.mxu0 %v746
        %1087 = vmatpush.xpose.msra.mxu0 %v743
        %1088 = vmatmul.f32.gmra.mxu0 %v449
        %v1089 = vpop.f32.mrf.mxu0
        %v1090 = vadd.f32 %v440, %v1089
        %1091 = vmatmul.f32.gmra.mxu0 %v452
        %v1092 = vpop.f32.mrf.mxu0
        %v1093 = vadd.f32 %v445, %v1092
        %1094 = vdwg.mxu0
        %1095 = vmatpush.xpose.msra.mxu0 %v836
        %1096 = vmatpush.xpose.msra.mxu0 %v833
        %1097 = vmatpush.xpose.msra.mxu0 %v830
        %1098 = vmatpush.xpose.msra.mxu0 %v827
        %1099 = vmatpush.xpose.msra.mxu0 %v824
        %1100 = vmatpush.xpose.msra.mxu0 %v821
        %1101 = vmatpush.xpose.msra.mxu0 %v818
        %1102 = vmatpush.xpose.msra.mxu0 %v815
        %1103 = vmatpush.xpose.msra.mxu0 %v812
        %1104 = vmatpush.xpose.msra.mxu0 %v809
        %1105 = vmatpush.xpose.msra.mxu0 %v806
        %1106 = vmatpush.xpose.msra.mxu0 %v803
        %1107 = vmatpush.xpose.msra.mxu0 %v800
        %1108 = vmatpush.xpose.msra.mxu0 %v797
        %1109 = vmatpush.xpose.msra.mxu0 %v794
        %1110 = vmatpush.xpose.msra.mxu0 %v791
        %1111 = vmatmul.f32.gmra.mxu0 %v449
        %v1112 = vpop.f32.mrf.mxu0
        %v1113 = vadd.f32 %v440, %v1112
        %1114 = vmatmul.f32.gmra.mxu0 %v452
        %v1115 = vpop.f32.mrf.mxu0
        %v1116 = vadd.f32 %v445, %v1115
        %1117 = vdwg.mxu0
        %1118 = vmatpush.xpose.msra.mxu0 %v884
        %1119 = vmatpush.xpose.msra.mxu0 %v881
        %1120 = vmatpush.xpose.msra.mxu0 %v878
        %1121 = vmatpush.xpose.msra.mxu0 %v875
        %1122 = vmatpush.xpose.msra.mxu0 %v872
        %1123 = vmatpush.xpose.msra.mxu0 %v869
        %1124 = vmatpush.xpose.msra.mxu0 %v866
        %1125 = vmatpush.xpose.msra.mxu0 %v863
        %1126 = vmatpush.xpose.msra.mxu0 %v860
        %1127 = vmatpush.xpose.msra.mxu0 %v857
        %1128 = vmatpush.xpose.msra.mxu0 %v854
        %1129 = vmatpush.xpose.msra.mxu0 %v851
        %1130 = vmatpush.xpose.msra.mxu0 %v848
        %1131 = vmatpush.xpose.msra.mxu0 %v845
        %1132 = vmatpush.xpose.msra.mxu0 %v842
        %1133 = vmatpush.xpose.msra.mxu0 %v839
        %1134 = vmatmul.f32.gmra.mxu0 %v449
        %v1135 = vpop.f32.mrf.mxu0
        %v1136 = vadd.f32 %v440, %v1135
        %1137 = vmatmul.f32.gmra.mxu0 %v452
        %v1138 = vpop.f32.mrf.mxu0
        %v1139 = vadd.f32 %v445, %v1138
        %1140 = vdwg.mxu0
        %1141 = vmatpush.xpose.msra.mxu0 %v932
        %1142 = vmatpush.xpose.msra.mxu0 %v929
        %1143 = vmatpush.xpose.msra.mxu0 %v926
        %1144 = vmatpush.xpose.msra.mxu0 %v923
        %1145 = vmatpush.xpose.msra.mxu0 %v920
        %1146 = vmatpush.xpose.msra.mxu0 %v917
        %1147 = vmatpush.xpose.msra.mxu0 %v914
        %1148 = vmatpush.xpose.msra.mxu0 %v911
        %1149 = vmatpush.xpose.msra.mxu0 %v908
        %1150 = vmatpush.xpose.msra.mxu0 %v905
        %1151 = vmatpush.xpose.msra.mxu0 %v902
        %1152 = vmatpush.xpose.msra.mxu0 %v899
        %1153 = vmatpush.xpose.msra.mxu0 %v896
        %1154 = vmatpush.xpose.msra.mxu0 %v893
        %1155 = vmatpush.xpose.msra.mxu0 %v890
        %1156 = vmatpush.xpose.msra.mxu0 %v887
        %1157 = vmatmul.f32.gmra.mxu0 %v449
        %v1158 = vpop.f32.mrf.mxu0
        %v1159 = vadd.f32 %v440, %v1158
        %1160 = vmatmul.f32.gmra.mxu0 %v452
        %v1161 = vpop.f32.mrf.mxu0
        %v1162 = vadd.f32 %v445, %v1161
        %1163 = vdwg.mxu0
        %v1164 = vtanh.pop %v952
        %v1165 = vtanh.pop %v975
        %v1166 = vtanh.pop %v998
        %v1167 = vtanh.pop %v1021
        %v1168 = vtanh.pop %v1044
        %v1169 = vtanh.pop %v1067
        %v1170 = vtanh.pop %v1090
        %v1171 = vtanh.pop %v1113
        %v1172 = vtanh.pop %v1136
        %v1173 = vtanh.pop %v1159
        %v1174 = vtanh.pop %v955
        %v1175 = vtanh.pop %v978
        %v1176 = vtanh.pop %v1001
        %v1177 = vtanh.pop %v1024
        %v1178 = vtanh.pop %v1047
        %v1179 = vtanh.pop %v1070
        %v1180 = vtanh.pop %v1093
        %v1181 = vtanh.pop %v1116
        %v1182 = vtanh.pop %v1139
        %v1183 = vtanh.pop %v1162
        %v1184 = vld [vmem:[%s2] sm:$0xff]
        %v1185 = vld [vmem:[%s2 + $0x8] sm:$0xff]
        %s1186 = scalar_lea.vmem %s3, 16
        %v1187 = vld [vmem:[%s1186] sm:$0xff]
        %v1188 = vld [vmem:[%s1186 + $0x8] sm:$0xff]
        %1190 = vset.pattern.permute.xlu0 0
        %1191 = vperm.xlu0 %1190, %v1187
        %v1192 = vpop.permute.xlu0 %1191
        %1195 = vset.pattern.permute.xlu0 0
        %1196 = vperm.xlu0 %1195, %v1188
        %v1197 = vpop.permute.xlu0 %1196
        %vm1199 = vcmask 130048
        %v1201 = vsel %vm1199, %v1184, 0
        %v1204 = vsel %vm1199, %v1185, 0
        %1206 = vmatpush.msra.mxu0 0.0
        %1207 = vmatpush.msra.mxu0 0.0
        %1208 = vmatpush.msra.mxu0 0.0
        %1209 = vmatpush.msra.mxu0 0.0
        %1210 = vmatpush.msra.mxu0 0.0
        %1211 = vmatpush.msra.mxu0 0.0
        %1212 = vmatpush.msra.mxu0 0.0
        %1213 = vmatpush.msra.mxu0 0.0
        %1214 = vmatpush.msra.mxu0 0.0
        %1215 = vmatpush.msra.mxu0 0.0
        %1216 = vmatpush.msra.mxu0 0.0
        %1217 = vmatpush.msra.mxu0 0.0
        %1218 = vmatpush.msra.mxu0 0.0
        %1219 = vmatpush.msra.mxu0 0.0
        %1220 = vmatpush.msra.mxu0 %v1174
        %1221 = vmatpush.msra.mxu0 %v1164
        %1222 = vmatmul.f32.gmra.mxu0 %v1201
        %v1223 = vpop.f32.mrf.mxu0
        %v1224 = vadd.f32 %v1192, %v1223
        %1225 = vmatmul.f32.gmra.mxu0 %v1204
        %v1226 = vpop.f32.mrf.mxu0
        %v1227 = vadd.f32 %v1197, %v1226
        %1228 = vdwg.mxu0
        %1229 = vmatpush.msra.mxu0 0.0
        %1230 = vmatpush.msra.mxu0 0.0
        %1231 = vmatpush.msra.mxu0 0.0
        %1232 = vmatpush.msra.mxu0 0.0
        %1233 = vmatpush.msra.mxu0 0.0
        %1234 = vmatpush.msra.mxu0 0.0
        %1235 = vmatpush.msra.mxu0 0.0
        %1236 = vmatpush.msra.mxu0 0.0
        %1237 = vmatpush.msra.mxu0 0.0
        %1238 = vmatpush.msra.mxu0 0.0
        %1239 = vmatpush.msra.mxu0 0.0
        %1240 = vmatpush.msra.mxu0 0.0
        %1241 = vmatpush.msra.mxu0 0.0
        %1242 = vmatpush.msra.mxu0 0.0
        %1243 = vmatpush.msra.mxu0 %v1175
        %1244 = vmatpush.msra.mxu0 %v1165
        %1245 = vmatmul.f32.gmra.mxu0 %v1201
        %v1246 = vpop.f32.mrf.mxu0
        %v1247 = vadd.f32 %v1192, %v1246
        %1248 = vmatmul.f32.gmra.mxu0 %v1204
        %v1249 = vpop.f32.mrf.mxu0
        %v1250 = vadd.f32 %v1197, %v1249
        %1251 = vdwg.mxu0
        %1252 = vmatpush.msra.mxu0 0.0
        %1253 = vmatpush.msra.mxu0 0.0
        %1254 = vmatpush.msra.mxu0 0.0
        %1255 = vmatpush.msra.mxu0 0.0
        %1256 = vmatpush.msra.mxu0 0.0
        %1257 = vmatpush.msra.mxu0 0.0
        %1258 = vmatpush.msra.mxu0 0.0
        %1259 = vmatpush.msra.mxu0 0.0
        %1260 = vmatpush.msra.mxu0 0.0
        %1261 = vmatpush.msra.mxu0 0.0
        %1262 = vmatpush.msra.mxu0 0.0
        %1263 = vmatpush.msra.mxu0 0.0
        %1264 = vmatpush.msra.mxu0 0.0
        %1265 = vmatpush.msra.mxu0 0.0
        %1266 = vmatpush.msra.mxu0 %v1176
        %1267 = vmatpush.msra.mxu0 %v1166
        %1268 = vmatmul.f32.gmra.mxu0 %v1201
        %v1269 = vpop.f32.mrf.mxu0
        %v1270 = vadd.f32 %v1192, %v1269
        %1271 = vmatmul.f32.gmra.mxu0 %v1204
        %v1272 = vpop.f32.mrf.mxu0
        %v1273 = vadd.f32 %v1197, %v1272
        %1274 = vdwg.mxu0
        %1275 = vmatpush.msra.mxu0 0.0
        %1276 = vmatpush.msra.mxu0 0.0
        %1277 = vmatpush.msra.mxu0 0.0
        %1278 = vmatpush.msra.mxu0 0.0
        %1279 = vmatpush.msra.mxu0 0.0
        %1280 = vmatpush.msra.mxu0 0.0
        %1281 = vmatpush.msra.mxu0 0.0
        %1282 = vmatpush.msra.mxu0 0.0
        %1283 = vmatpush.msra.mxu0 0.0
        %1284 = vmatpush.msra.mxu0 0.0
        %1285 = vmatpush.msra.mxu0 0.0
        %1286 = vmatpush.msra.mxu0 0.0
        %1287 = vmatpush.msra.mxu0 0.0
        %1288 = vmatpush.msra.mxu0 0.0
        %1289 = vmatpush.msra.mxu0 %v1177
        %1290 = vmatpush.msra.mxu0 %v1167
        %1291 = vmatmul.f32.gmra.mxu0 %v1201
        %v1292 = vpop.f32.mrf.mxu0
        %v1293 = vadd.f32 %v1192, %v1292
        %1294 = vmatmul.f32.gmra.mxu0 %v1204
        %v1295 = vpop.f32.mrf.mxu0
        %v1296 = vadd.f32 %v1197, %v1295
        %1297 = vdwg.mxu0
        %1298 = vmatpush.msra.mxu0 0.0
        %1299 = vmatpush.msra.mxu0 0.0
        %1300 = vmatpush.msra.mxu0 0.0
        %1301 = vmatpush.msra.mxu0 0.0
        %1302 = vmatpush.msra.mxu0 0.0
        %1303 = vmatpush.msra.mxu0 0.0
        %1304 = vmatpush.msra.mxu0 0.0
        %1305 = vmatpush.msra.mxu0 0.0
        %1306 = vmatpush.msra.mxu0 0.0
        %1307 = vmatpush.msra.mxu0 0.0
        %1308 = vmatpush.msra.mxu0 0.0
        %1309 = vmatpush.msra.mxu0 0.0
        %1310 = vmatpush.msra.mxu0 0.0
        %1311 = vmatpush.msra.mxu0 0.0
        %1312 = vmatpush.msra.mxu0 %v1178
        %1313 = vmatpush.msra.mxu0 %v1168
        %1314 = vmatmul.f32.gmra.mxu0 %v1201
        %v1315 = vpop.f32.mrf.mxu0
        %v1316 = vadd.f32 %v1192, %v1315
        %1317 = vmatmul.f32.gmra.mxu0 %v1204
        %v1318 = vpop.f32.mrf.mxu0
        %v1319 = vadd.f32 %v1197, %v1318
        %1320 = vdwg.mxu0
        %1321 = vmatpush.msra.mxu0 0.0
        %1322 = vmatpush.msra.mxu0 0.0
        %1323 = vmatpush.msra.mxu0 0.0
        %1324 = vmatpush.msra.mxu0 0.0
        %1325 = vmatpush.msra.mxu0 0.0
        %1326 = vmatpush.msra.mxu0 0.0
        %1327 = vmatpush.msra.mxu0 0.0
        %1328 = vmatpush.msra.mxu0 0.0
        %1329 = vmatpush.msra.mxu0 0.0
        %1330 = vmatpush.msra.mxu0 0.0
        %1331 = vmatpush.msra.mxu0 0.0
        %1332 = vmatpush.msra.mxu0 0.0
        %1333 = vmatpush.msra.mxu0 0.0
        %1334 = vmatpush.msra.mxu0 0.0
        %1335 = vmatpush.msra.mxu0 %v1179
        %1336 = vmatpush.msra.mxu0 %v1169
        %1337 = vmatmul.f32.gmra.mxu0 %v1201
        %v1338 = vpop.f32.mrf.mxu0
        %v1339 = vadd.f32 %v1192, %v1338
        %1340 = vmatmul.f32.gmra.mxu0 %v1204
        %v1341 = vpop.f32.mrf.mxu0
        %v1342 = vadd.f32 %v1197, %v1341
        %1343 = vdwg.mxu0
        %1344 = vmatpush.msra.mxu0 0.0
        %1345 = vmatpush.msra.mxu0 0.0
        %1346 = vmatpush.msra.mxu0 0.0
        %1347 = vmatpush.msra.mxu0 0.0
        %1348 = vmatpush.msra.mxu0 0.0
        %1349 = vmatpush.msra.mxu0 0.0
        %1350 = vmatpush.msra.mxu0 0.0
        %1351 = vmatpush.msra.mxu0 0.0
        %1352 = vmatpush.msra.mxu0 0.0
        %1353 = vmatpush.msra.mxu0 0.0
        %1354 = vmatpush.msra.mxu0 0.0
        %1355 = vmatpush.msra.mxu0 0.0
        %1356 = vmatpush.msra.mxu0 0.0
        %1357 = vmatpush.msra.mxu0 0.0
        %1358 = vmatpush.msra.mxu0 %v1180
        %1359 = vmatpush.msra.mxu0 %v1170
        %1360 = vmatmul.f32.gmra.mxu0 %v1201
        %v1361 = vpop.f32.mrf.mxu0
        %v1362 = vadd.f32 %v1192, %v1361
        %1363 = vmatmul.f32.gmra.mxu0 %v1204
        %v1364 = vpop.f32.mrf.mxu0
        %v1365 = vadd.f32 %v1197, %v1364
        %1366 = vdwg.mxu0
        %1367 = vmatpush.msra.mxu0 0.0
        %1368 = vmatpush.msra.mxu0 0.0
        %1369 = vmatpush.msra.mxu0 0.0
        %1370 = vmatpush.msra.mxu0 0.0
        %1371 = vmatpush.msra.mxu0 0.0
        %1372 = vmatpush.msra.mxu0 0.0
        %1373 = vmatpush.msra.mxu0 0.0
        %1374 = vmatpush.msra.mxu0 0.0
        %1375 = vmatpush.msra.mxu0 0.0
        %1376 = vmatpush.msra.mxu0 0.0
        %1377 = vmatpush.msra.mxu0 0.0
        %1378 = vmatpush.msra.mxu0 0.0
        %1379 = vmatpush.msra.mxu0 0.0
        %1380 = vmatpush.msra.mxu0 0.0
        %1381 = vmatpush.msra.mxu0 %v1181
        %1382 = vmatpush.msra.mxu0 %v1171
        %1383 = vmatmul.f32.gmra.mxu0 %v1201
        %v1384 = vpop.f32.mrf.mxu0
        %v1385 = vadd.f32 %v1192, %v1384
        %1386 = vmatmul.f32.gmra.mxu0 %v1204
        %v1387 = vpop.f32.mrf.mxu0
        %v1388 = vadd.f32 %v1197, %v1387
        %1389 = vdwg.mxu0
        %1390 = vmatpush.msra.mxu0 0.0
        %1391 = vmatpush.msra.mxu0 0.0
        %1392 = vmatpush.msra.mxu0 0.0
        %1393 = vmatpush.msra.mxu0 0.0
        %1394 = vmatpush.msra.mxu0 0.0
        %1395 = vmatpush.msra.mxu0 0.0
        %1396 = vmatpush.msra.mxu0 0.0
        %1397 = vmatpush.msra.mxu0 0.0
        %1398 = vmatpush.msra.mxu0 0.0
        %1399 = vmatpush.msra.mxu0 0.0
        %1400 = vmatpush.msra.mxu0 0.0
        %1401 = vmatpush.msra.mxu0 0.0
        %1402 = vmatpush.msra.mxu0 0.0
        %1403 = vmatpush.msra.mxu0 0.0
        %1404 = vmatpush.msra.mxu0 %v1182
        %1405 = vmatpush.msra.mxu0 %v1172
        %1406 = vmatmul.f32.gmra.mxu0 %v1201
        %v1407 = vpop.f32.mrf.mxu0
        %v1408 = vadd.f32 %v1192, %v1407
        %1409 = vmatmul.f32.gmra.mxu0 %v1204
        %v1410 = vpop.f32.mrf.mxu0
        %v1411 = vadd.f32 %v1197, %v1410
        %1412 = vdwg.mxu0
        %1413 = vmatpush.msra.mxu0 0.0
        %1414 = vmatpush.msra.mxu0 0.0
        %1415 = vmatpush.msra.mxu0 0.0
        %1416 = vmatpush.msra.mxu0 0.0
        %1417 = vmatpush.msra.mxu0 0.0
        %1418 = vmatpush.msra.mxu0 0.0
        %1419 = vmatpush.msra.mxu0 0.0
        %1420 = vmatpush.msra.mxu0 0.0
        %1421 = vmatpush.msra.mxu0 0.0
        %1422 = vmatpush.msra.mxu0 0.0
        %1423 = vmatpush.msra.mxu0 0.0
        %1424 = vmatpush.msra.mxu0 0.0
        %1425 = vmatpush.msra.mxu0 0.0
        %1426 = vmatpush.msra.mxu0 0.0
        %1427 = vmatpush.msra.mxu0 %v1183
        %1428 = vmatpush.msra.mxu0 %v1173
        %1429 = vmatmul.f32.gmra.mxu0 %v1201
        %v1430 = vpop.f32.mrf.mxu0
        %v1431 = vadd.f32 %v1192, %v1430
        %1432 = vmatmul.f32.gmra.mxu0 %v1204
        %v1433 = vpop.f32.mrf.mxu0
        %v1434 = vadd.f32 %v1197, %v1433
        %1435 = vdwg.mxu0
        %v1436 = vtanh.pop %v1224
        %v1437 = vtanh.pop %v1247
        %v1438 = vtanh.pop %v1270
        %v1439 = vtanh.pop %v1293
        %v1440 = vtanh.pop %v1316
        %v1441 = vtanh.pop %v1339
        %v1442 = vtanh.pop %v1362
        %v1443 = vtanh.pop %v1385
        %v1444 = vtanh.pop %v1408
        %v1445 = vtanh.pop %v1431
        %v1446 = vtanh.pop %v1227
        %v1447 = vtanh.pop %v1250
        %v1448 = vtanh.pop %v1273
        %v1449 = vtanh.pop %v1296
        %v1450 = vtanh.pop %v1319
        %v1451 = vtanh.pop %v1342
        %v1452 = vtanh.pop %v1365
        %v1453 = vtanh.pop %v1388
        %v1454 = vtanh.pop %v1411
        %v1455 = vtanh.pop %v1434
        %s1456 = scalar_lea.vmem %s2, 16
        %v1457 = vld [vmem:[%s1456] sm:$0xff]
        %v1458 = vld [vmem:[%s1456 + $0x8] sm:$0xff]
        %s1459 = scalar_lea.vmem %s3, 32
        %v1460 = vld [vmem:[%s1459] sm:$0xff]
        %v1461 = vld [vmem:[%s1459 + $0x8] sm:$0xff]
        %1463 = vset.pattern.permute.xlu0 0
        %1464 = vperm.xlu0 %1463, %v1460
        %v1465 = vpop.permute.xlu0 %1464
        %1468 = vset.pattern.permute.xlu0 0
        %1469 = vperm.xlu0 %1468, %v1461
        %v1470 = vpop.permute.xlu0 %1469
        %v1473 = vsel %vm1199, %v1457, 0
        %v1476 = vsel %vm1199, %v1458, 0
        %1478 = vmatpush.msra.mxu0 0.0
        %1479 = vmatpush.msra.mxu0 0.0
        %1480 = vmatpush.msra.mxu0 0.0
        %1481 = vmatpush.msra.mxu0 0.0
        %1482 = vmatpush.msra.mxu0 0.0
        %1483 = vmatpush.msra.mxu0 0.0
        %1484 = vmatpush.msra.mxu0 0.0
        %1485 = vmatpush.msra.mxu0 0.0
        %1486 = vmatpush.msra.mxu0 0.0
        %1487 = vmatpush.msra.mxu0 0.0
        %1488 = vmatpush.msra.mxu0 0.0
        %1489 = vmatpush.msra.mxu0 0.0
        %1490 = vmatpush.msra.mxu0 0.0
        %1491 = vmatpush.msra.mxu0 0.0
        %1492 = vmatpush.msra.mxu0 %v1446
        %1493 = vmatpush.msra.mxu0 %v1436
        %1494 = vmatmul.f32.gmra.mxu0 %v1473
        %v1495 = vpop.f32.mrf.mxu0
        %v1496 = vadd.f32 %v1465, %v1495
        %1497 = vmatmul.f32.gmra.mxu0 %v1476
        %v1498 = vpop.f32.mrf.mxu0
        %v1499 = vadd.f32 %v1470, %v1498
        %1500 = vdwg.mxu0
        %1501 = vmatpush.msra.mxu0 0.0
        %1502 = vmatpush.msra.mxu0 0.0
        %1503 = vmatpush.msra.mxu0 0.0
        %1504 = vmatpush.msra.mxu0 0.0
        %1505 = vmatpush.msra.mxu0 0.0
        %1506 = vmatpush.msra.mxu0 0.0
        %1507 = vmatpush.msra.mxu0 0.0
        %1508 = vmatpush.msra.mxu0 0.0
        %1509 = vmatpush.msra.mxu0 0.0
        %1510 = vmatpush.msra.mxu0 0.0
        %1511 = vmatpush.msra.mxu0 0.0
        %1512 = vmatpush.msra.mxu0 0.0
        %1513 = vmatpush.msra.mxu0 0.0
        %1514 = vmatpush.msra.mxu0 0.0
        %1515 = vmatpush.msra.mxu0 %v1447
        %1516 = vmatpush.msra.mxu0 %v1437
        %1517 = vmatmul.f32.gmra.mxu0 %v1473
        %v1518 = vpop.f32.mrf.mxu0
        %v1519 = vadd.f32 %v1465, %v1518
        %1520 = vmatmul.f32.gmra.mxu0 %v1476
        %v1521 = vpop.f32.mrf.mxu0
        %v1522 = vadd.f32 %v1470, %v1521
        %1523 = vdwg.mxu0
        %1524 = vmatpush.msra.mxu0 0.0
        %1525 = vmatpush.msra.mxu0 0.0
        %1526 = vmatpush.msra.mxu0 0.0
        %1527 = vmatpush.msra.mxu0 0.0
        %1528 = vmatpush.msra.mxu0 0.0
        %1529 = vmatpush.msra.mxu0 0.0
        %1530 = vmatpush.msra.mxu0 0.0
        %1531 = vmatpush.msra.mxu0 0.0
        %1532 = vmatpush.msra.mxu0 0.0
        %1533 = vmatpush.msra.mxu0 0.0
        %1534 = vmatpush.msra.mxu0 0.0
        %1535 = vmatpush.msra.mxu0 0.0
        %1536 = vmatpush.msra.mxu0 0.0
        %1537 = vmatpush.msra.mxu0 0.0
        %1538 = vmatpush.msra.mxu0 %v1448
        %1539 = vmatpush.msra.mxu0 %v1438
        %1540 = vmatmul.f32.gmra.mxu0 %v1473
        %v1541 = vpop.f32.mrf.mxu0
        %v1542 = vadd.f32 %v1465, %v1541
        %1543 = vmatmul.f32.gmra.mxu0 %v1476
        %v1544 = vpop.f32.mrf.mxu0
        %v1545 = vadd.f32 %v1470, %v1544
        %1546 = vdwg.mxu0
        %1547 = vmatpush.msra.mxu0 0.0
        %1548 = vmatpush.msra.mxu0 0.0
        %1549 = vmatpush.msra.mxu0 0.0
        %1550 = vmatpush.msra.mxu0 0.0
        %1551 = vmatpush.msra.mxu0 0.0
        %1552 = vmatpush.msra.mxu0 0.0
        %1553 = vmatpush.msra.mxu0 0.0
        %1554 = vmatpush.msra.mxu0 0.0
        %1555 = vmatpush.msra.mxu0 0.0
        %1556 = vmatpush.msra.mxu0 0.0
        %1557 = vmatpush.msra.mxu0 0.0
        %1558 = vmatpush.msra.mxu0 0.0
        %1559 = vmatpush.msra.mxu0 0.0
        %1560 = vmatpush.msra.mxu0 0.0
        %1561 = vmatpush.msra.mxu0 %v1449
        %1562 = vmatpush.msra.mxu0 %v1439
        %1563 = vmatmul.f32.gmra.mxu0 %v1473
        %v1564 = vpop.f32.mrf.mxu0
        %v1565 = vadd.f32 %v1465, %v1564
        %1566 = vmatmul.f32.gmra.mxu0 %v1476
        %v1567 = vpop.f32.mrf.mxu0
        %v1568 = vadd.f32 %v1470, %v1567
        %1569 = vdwg.mxu0
        %1570 = vmatpush.msra.mxu0 0.0
        %1571 = vmatpush.msra.mxu0 0.0
        %1572 = vmatpush.msra.mxu0 0.0
        %1573 = vmatpush.msra.mxu0 0.0
        %1574 = vmatpush.msra.mxu0 0.0
        %1575 = vmatpush.msra.mxu0 0.0
        %1576 = vmatpush.msra.mxu0 0.0
        %1577 = vmatpush.msra.mxu0 0.0
        %1578 = vmatpush.msra.mxu0 0.0
        %1579 = vmatpush.msra.mxu0 0.0
        %1580 = vmatpush.msra.mxu0 0.0
        %1581 = vmatpush.msra.mxu0 0.0
        %1582 = vmatpush.msra.mxu0 0.0
        %1583 = vmatpush.msra.mxu0 0.0
        %1584 = vmatpush.msra.mxu0 %v1450
        %1585 = vmatpush.msra.mxu0 %v1440
        %1586 = vmatmul.f32.gmra.mxu0 %v1473
        %v1587 = vpop.f32.mrf.mxu0
        %v1588 = vadd.f32 %v1465, %v1587
        %1589 = vmatmul.f32.gmra.mxu0 %v1476
        %v1590 = vpop.f32.mrf.mxu0
        %v1591 = vadd.f32 %v1470, %v1590
        %1592 = vdwg.mxu0
        %1593 = vmatpush.msra.mxu0 0.0
        %1594 = vmatpush.msra.mxu0 0.0
        %1595 = vmatpush.msra.mxu0 0.0
        %1596 = vmatpush.msra.mxu0 0.0
        %1597 = vmatpush.msra.mxu0 0.0
        %1598 = vmatpush.msra.mxu0 0.0
        %1599 = vmatpush.msra.mxu0 0.0
        %1600 = vmatpush.msra.mxu0 0.0
        %1601 = vmatpush.msra.mxu0 0.0
        %1602 = vmatpush.msra.mxu0 0.0
        %1603 = vmatpush.msra.mxu0 0.0
        %1604 = vmatpush.msra.mxu0 0.0
        %1605 = vmatpush.msra.mxu0 0.0
        %1606 = vmatpush.msra.mxu0 0.0
        %1607 = vmatpush.msra.mxu0 %v1451
        %1608 = vmatpush.msra.mxu0 %v1441
        %1609 = vmatmul.f32.gmra.mxu0 %v1473
        %v1610 = vpop.f32.mrf.mxu0
        %v1611 = vadd.f32 %v1465, %v1610
        %1612 = vmatmul.f32.gmra.mxu0 %v1476
        %v1613 = vpop.f32.mrf.mxu0
        %v1614 = vadd.f32 %v1470, %v1613
        %1615 = vdwg.mxu0
        %1616 = vmatpush.msra.mxu0 0.0
        %1617 = vmatpush.msra.mxu0 0.0
        %1618 = vmatpush.msra.mxu0 0.0
        %1619 = vmatpush.msra.mxu0 0.0
        %1620 = vmatpush.msra.mxu0 0.0
        %1621 = vmatpush.msra.mxu0 0.0
        %1622 = vmatpush.msra.mxu0 0.0
        %1623 = vmatpush.msra.mxu0 0.0
        %1624 = vmatpush.msra.mxu0 0.0
        %1625 = vmatpush.msra.mxu0 0.0
        %1626 = vmatpush.msra.mxu0 0.0
        %1627 = vmatpush.msra.mxu0 0.0
        %1628 = vmatpush.msra.mxu0 0.0
        %1629 = vmatpush.msra.mxu0 0.0
        %1630 = vmatpush.msra.mxu0 %v1452
        %1631 = vmatpush.msra.mxu0 %v1442
        %1632 = vmatmul.f32.gmra.mxu0 %v1473
        %v1633 = vpop.f32.mrf.mxu0
        %v1634 = vadd.f32 %v1465, %v1633
        %1635 = vmatmul.f32.gmra.mxu0 %v1476
        %v1636 = vpop.f32.mrf.mxu0
        %v1637 = vadd.f32 %v1470, %v1636
        %1638 = vdwg.mxu0
        %1639 = vmatpush.msra.mxu0 0.0
        %1640 = vmatpush.msra.mxu0 0.0
        %1641 = vmatpush.msra.mxu0 0.0
        %1642 = vmatpush.msra.mxu0 0.0
        %1643 = vmatpush.msra.mxu0 0.0
        %1644 = vmatpush.msra.mxu0 0.0
        %1645 = vmatpush.msra.mxu0 0.0
        %1646 = vmatpush.msra.mxu0 0.0
        %1647 = vmatpush.msra.mxu0 0.0
        %1648 = vmatpush.msra.mxu0 0.0
        %1649 = vmatpush.msra.mxu0 0.0
        %1650 = vmatpush.msra.mxu0 0.0
        %1651 = vmatpush.msra.mxu0 0.0
        %1652 = vmatpush.msra.mxu0 0.0
        %1653 = vmatpush.msra.mxu0 %v1453
        %1654 = vmatpush.msra.mxu0 %v1443
        %1655 = vmatmul.f32.gmra.mxu0 %v1473
        %v1656 = vpop.f32.mrf.mxu0
        %v1657 = vadd.f32 %v1465, %v1656
        %1658 = vmatmul.f32.gmra.mxu0 %v1476
        %v1659 = vpop.f32.mrf.mxu0
        %v1660 = vadd.f32 %v1470, %v1659
        %1661 = vdwg.mxu0
        %1662 = vmatpush.msra.mxu0 0.0
        %1663 = vmatpush.msra.mxu0 0.0
        %1664 = vmatpush.msra.mxu0 0.0
        %1665 = vmatpush.msra.mxu0 0.0
        %1666 = vmatpush.msra.mxu0 0.0
        %1667 = vmatpush.msra.mxu0 0.0
        %1668 = vmatpush.msra.mxu0 0.0
        %1669 = vmatpush.msra.mxu0 0.0
        %1670 = vmatpush.msra.mxu0 0.0
        %1671 = vmatpush.msra.mxu0 0.0
        %1672 = vmatpush.msra.mxu0 0.0
        %1673 = vmatpush.msra.mxu0 0.0
        %1674 = vmatpush.msra.mxu0 0.0
        %1675 = vmatpush.msra.mxu0 0.0
        %1676 = vmatpush.msra.mxu0 %v1454
        %1677 = vmatpush.msra.mxu0 %v1444
        %1678 = vmatmul.f32.gmra.mxu0 %v1473
        %v1679 = vpop.f32.mrf.mxu0
        %v1680 = vadd.f32 %v1465, %v1679
        %1681 = vmatmul.f32.gmra.mxu0 %v1476
        %v1682 = vpop.f32.mrf.mxu0
        %v1683 = vadd.f32 %v1470, %v1682
        %1684 = vdwg.mxu0
        %1685 = vmatpush.msra.mxu0 0.0
        %1686 = vmatpush.msra.mxu0 0.0
        %1687 = vmatpush.msra.mxu0 0.0
        %1688 = vmatpush.msra.mxu0 0.0
        %1689 = vmatpush.msra.mxu0 0.0
        %1690 = vmatpush.msra.mxu0 0.0
        %1691 = vmatpush.msra.mxu0 0.0
        %1692 = vmatpush.msra.mxu0 0.0
        %1693 = vmatpush.msra.mxu0 0.0
        %1694 = vmatpush.msra.mxu0 0.0
        %1695 = vmatpush.msra.mxu0 0.0
        %1696 = vmatpush.msra.mxu0 0.0
        %1697 = vmatpush.msra.mxu0 0.0
        %1698 = vmatpush.msra.mxu0 0.0
        %1699 = vmatpush.msra.mxu0 %v1455
        %1700 = vmatpush.msra.mxu0 %v1445
        %1701 = vmatmul.f32.gmra.mxu0 %v1473
        %v1702 = vpop.f32.mrf.mxu0
        %v1703 = vadd.f32 %v1465, %v1702
        %1704 = vmatmul.f32.gmra.mxu0 %v1476
        %v1705 = vpop.f32.mrf.mxu0
        %v1706 = vadd.f32 %v1470, %v1705
        %1707 = vdwg.mxu0
        %v1708 = vtanh.pop %v1496
        %v1709 = vtanh.pop %v1519
        %v1710 = vtanh.pop %v1542
        %v1711 = vtanh.pop %v1565
        %v1712 = vtanh.pop %v1588
        %v1713 = vtanh.pop %v1611
        %v1714 = vtanh.pop %v1634
        %v1715 = vtanh.pop %v1657
        %v1716 = vtanh.pop %v1680
        %v1717 = vtanh.pop %v1703
        %v1718 = vtanh.pop %v1499
        %v1719 = vtanh.pop %v1522
        %v1720 = vtanh.pop %v1545
        %v1721 = vtanh.pop %v1568
        %v1722 = vtanh.pop %v1591
        %v1723 = vtanh.pop %v1614
        %v1724 = vtanh.pop %v1637
        %v1725 = vtanh.pop %v1660
        %v1726 = vtanh.pop %v1683
        %v1727 = vtanh.pop %v1706
        %v1728 = vld [vmem:[%s4] sm:$0xff]
        %v1729 = vld [vmem:[%s5] sm:$0xff]
        %1731 = vset.pattern.permute.xlu0 0
        %1732 = vperm.xlu0 %1731, %v1729
        %v1733 = vpop.permute.xlu0 %1732
        %v1736 = vsel %vm1199, %v1728, 0
        %1738 = vmatpush.msra.mxu0 0.0
        %1739 = vmatpush.msra.mxu0 0.0
        %1740 = vmatpush.msra.mxu0 0.0
        %1741 = vmatpush.msra.mxu0 0.0
        %1742 = vmatpush.msra.mxu0 0.0
        %1743 = vmatpush.msra.mxu0 0.0
        %1744 = vmatpush.msra.mxu0 0.0
        %1745 = vmatpush.msra.mxu0 0.0
        %1746 = vmatpush.msra.mxu0 0.0
        %1747 = vmatpush.msra.mxu0 0.0
        %1748 = vmatpush.msra.mxu0 0.0
        %1749 = vmatpush.msra.mxu0 0.0
        %1750 = vmatpush.msra.mxu0 0.0
        %1751 = vmatpush.msra.mxu0 0.0
        %1752 = vmatpush.msra.mxu0 %v1718
        %1753 = vmatpush.msra.mxu0 %v1708
        %1754 = vmatmul.f32.gmra.mxu0 %v1736
        %v1755 = vpop.f32.mrf.mxu0
        %v1756 = vadd.f32 %v1733, %v1755
        %1757 = vdwg.mxu0
        %1758 = vmatpush.msra.mxu0 0.0
        %1759 = vmatpush.msra.mxu0 0.0
        %1760 = vmatpush.msra.mxu0 0.0
        %1761 = vmatpush.msra.mxu0 0.0
        %1762 = vmatpush.msra.mxu0 0.0
        %1763 = vmatpush.msra.mxu0 0.0
        %1764 = vmatpush.msra.mxu0 0.0
        %1765 = vmatpush.msra.mxu0 0.0
        %1766 = vmatpush.msra.mxu0 0.0
        %1767 = vmatpush.msra.mxu0 0.0
        %1768 = vmatpush.msra.mxu0 0.0
        %1769 = vmatpush.msra.mxu0 0.0
        %1770 = vmatpush.msra.mxu0 0.0
        %1771 = vmatpush.msra.mxu0 0.0
        %1772 = vmatpush.msra.mxu0 %v1719
        %1773 = vmatpush.msra.mxu0 %v1709
        %1774 = vmatmul.f32.gmra.mxu0 %v1736
        %v1775 = vpop.f32.mrf.mxu0
        %v1776 = vadd.f32 %v1733, %v1775
        %1777 = vdwg.mxu0
        %1778 = vmatpush.msra.mxu0 0.0
        %1779 = vmatpush.msra.mxu0 0.0
        %1780 = vmatpush.msra.mxu0 0.0
        %1781 = vmatpush.msra.mxu0 0.0
        %1782 = vmatpush.msra.mxu0 0.0
        %1783 = vmatpush.msra.mxu0 0.0
        %1784 = vmatpush.msra.mxu0 0.0
        %1785 = vmatpush.msra.mxu0 0.0
        %1786 = vmatpush.msra.mxu0 0.0
        %1787 = vmatpush.msra.mxu0 0.0
        %1788 = vmatpush.msra.mxu0 0.0
        %1789 = vmatpush.msra.mxu0 0.0
        %1790 = vmatpush.msra.mxu0 0.0
        %1791 = vmatpush.msra.mxu0 0.0
        %1792 = vmatpush.msra.mxu0 %v1720
        %1793 = vmatpush.msra.mxu0 %v1710
        %1794 = vmatmul.f32.gmra.mxu0 %v1736
        %v1795 = vpop.f32.mrf.mxu0
        %v1796 = vadd.f32 %v1733, %v1795
        %1797 = vdwg.mxu0
        %1798 = vmatpush.msra.mxu0 0.0
        %1799 = vmatpush.msra.mxu0 0.0
        %1800 = vmatpush.msra.mxu0 0.0
        %1801 = vmatpush.msra.mxu0 0.0
        %1802 = vmatpush.msra.mxu0 0.0
        %1803 = vmatpush.msra.mxu0 0.0
        %1804 = vmatpush.msra.mxu0 0.0
        %1805 = vmatpush.msra.mxu0 0.0
        %1806 = vmatpush.msra.mxu0 0.0
        %1807 = vmatpush.msra.mxu0 0.0
        %1808 = vmatpush.msra.mxu0 0.0
        %1809 = vmatpush.msra.mxu0 0.0
        %1810 = vmatpush.msra.mxu0 0.0
        %1811 = vmatpush.msra.mxu0 0.0
        %1812 = vmatpush.msra.mxu0 %v1721
        %1813 = vmatpush.msra.mxu0 %v1711
        %1814 = vmatmul.f32.gmra.mxu0 %v1736
        %v1815 = vpop.f32.mrf.mxu0
        %v1816 = vadd.f32 %v1733, %v1815
        %1817 = vdwg.mxu0
        %1818 = vmatpush.msra.mxu0 0.0
        %1819 = vmatpush.msra.mxu0 0.0
        %1820 = vmatpush.msra.mxu0 0.0
        %1821 = vmatpush.msra.mxu0 0.0
        %1822 = vmatpush.msra.mxu0 0.0
        %1823 = vmatpush.msra.mxu0 0.0
        %1824 = vmatpush.msra.mxu0 0.0
        %1825 = vmatpush.msra.mxu0 0.0
        %1826 = vmatpush.msra.mxu0 0.0
        %1827 = vmatpush.msra.mxu0 0.0
        %1828 = vmatpush.msra.mxu0 0.0
        %1829 = vmatpush.msra.mxu0 0.0
        %1830 = vmatpush.msra.mxu0 0.0
        %1831 = vmatpush.msra.mxu0 0.0
        %1832 = vmatpush.msra.mxu0 %v1722
        %1833 = vmatpush.msra.mxu0 %v1712
        %1834 = vmatmul.f32.gmra.mxu0 %v1736
        %v1835 = vpop.f32.mrf.mxu0
        %v1836 = vadd.f32 %v1733, %v1835
        %1837 = vdwg.mxu0
        %1838 = vmatpush.msra.mxu0 0.0
        %1839 = vmatpush.msra.mxu0 0.0
        %1840 = vmatpush.msra.mxu0 0.0
        %1841 = vmatpush.msra.mxu0 0.0
        %1842 = vmatpush.msra.mxu0 0.0
        %1843 = vmatpush.msra.mxu0 0.0
        %1844 = vmatpush.msra.mxu0 0.0
        %1845 = vmatpush.msra.mxu0 0.0
        %1846 = vmatpush.msra.mxu0 0.0
        %1847 = vmatpush.msra.mxu0 0.0
        %1848 = vmatpush.msra.mxu0 0.0
        %1849 = vmatpush.msra.mxu0 0.0
        %1850 = vmatpush.msra.mxu0 0.0
        %1851 = vmatpush.msra.mxu0 0.0
        %1852 = vmatpush.msra.mxu0 %v1723
        %1853 = vmatpush.msra.mxu0 %v1713
        %1854 = vmatmul.f32.gmra.mxu0 %v1736
        %v1855 = vpop.f32.mrf.mxu0
        %v1856 = vadd.f32 %v1733, %v1855
        %1857 = vdwg.mxu0
        %1858 = vmatpush.msra.mxu0 0.0
        %1859 = vmatpush.msra.mxu0 0.0
        %1860 = vmatpush.msra.mxu0 0.0
        %1861 = vmatpush.msra.mxu0 0.0
        %1862 = vmatpush.msra.mxu0 0.0
        %1863 = vmatpush.msra.mxu0 0.0
        %1864 = vmatpush.msra.mxu0 0.0
        %1865 = vmatpush.msra.mxu0 0.0
        %1866 = vmatpush.msra.mxu0 0.0
        %1867 = vmatpush.msra.mxu0 0.0
        %1868 = vmatpush.msra.mxu0 0.0
        %1869 = vmatpush.msra.mxu0 0.0
        %1870 = vmatpush.msra.mxu0 0.0
        %1871 = vmatpush.msra.mxu0 0.0
        %1872 = vmatpush.msra.mxu0 %v1724
        %1873 = vmatpush.msra.mxu0 %v1714
        %1874 = vmatmul.f32.gmra.mxu0 %v1736
        %v1875 = vpop.f32.mrf.mxu0
        %v1876 = vadd.f32 %v1733, %v1875
        %1877 = vdwg.mxu0
        %1878 = vmatpush.msra.mxu0 0.0
        %1879 = vmatpush.msra.mxu0 0.0
        %1880 = vmatpush.msra.mxu0 0.0
        %1881 = vmatpush.msra.mxu0 0.0
        %1882 = vmatpush.msra.mxu0 0.0
        %1883 = vmatpush.msra.mxu0 0.0
        %1884 = vmatpush.msra.mxu0 0.0
        %1885 = vmatpush.msra.mxu0 0.0
        %1886 = vmatpush.msra.mxu0 0.0
        %1887 = vmatpush.msra.mxu0 0.0
        %1888 = vmatpush.msra.mxu0 0.0
        %1889 = vmatpush.msra.mxu0 0.0
        %1890 = vmatpush.msra.mxu0 0.0
        %1891 = vmatpush.msra.mxu0 0.0
        %1892 = vmatpush.msra.mxu0 %v1725
        %1893 = vmatpush.msra.mxu0 %v1715
        %1894 = vmatmul.f32.gmra.mxu0 %v1736
        %v1895 = vpop.f32.mrf.mxu0
        %v1896 = vadd.f32 %v1733, %v1895
        %1897 = vdwg.mxu0
        %1898 = vmatpush.msra.mxu0 0.0
        %1899 = vmatpush.msra.mxu0 0.0
        %1900 = vmatpush.msra.mxu0 0.0
        %1901 = vmatpush.msra.mxu0 0.0
        %1902 = vmatpush.msra.mxu0 0.0
        %1903 = vmatpush.msra.mxu0 0.0
        %1904 = vmatpush.msra.mxu0 0.0
        %1905 = vmatpush.msra.mxu0 0.0
        %1906 = vmatpush.msra.mxu0 0.0
        %1907 = vmatpush.msra.mxu0 0.0
        %1908 = vmatpush.msra.mxu0 0.0
        %1909 = vmatpush.msra.mxu0 0.0
        %1910 = vmatpush.msra.mxu0 0.0
        %1911 = vmatpush.msra.mxu0 0.0
        %1912 = vmatpush.msra.mxu0 %v1726
        %1913 = vmatpush.msra.mxu0 %v1716
        %1914 = vmatmul.f32.gmra.mxu0 %v1736
        %v1915 = vpop.f32.mrf.mxu0
        %v1916 = vadd.f32 %v1733, %v1915
        %1917 = vdwg.mxu0
        %1918 = vmatpush.msra.mxu0 0.0
        %1919 = vmatpush.msra.mxu0 0.0
        %1920 = vmatpush.msra.mxu0 0.0
        %1921 = vmatpush.msra.mxu0 0.0
        %1922 = vmatpush.msra.mxu0 0.0
        %1923 = vmatpush.msra.mxu0 0.0
        %1924 = vmatpush.msra.mxu0 0.0
        %1925 = vmatpush.msra.mxu0 0.0
        %1926 = vmatpush.msra.mxu0 0.0
        %1927 = vmatpush.msra.mxu0 0.0
        %1928 = vmatpush.msra.mxu0 0.0
        %1929 = vmatpush.msra.mxu0 0.0
        %1930 = vmatpush.msra.mxu0 0.0
        %1931 = vmatpush.msra.mxu0 0.0
        %1932 = vmatpush.msra.mxu0 %v1727
        %1933 = vmatpush.msra.mxu0 %v1717
        %1934 = vmatmul.f32.gmra.mxu0 %v1736
        %v1935 = vpop.f32.mrf.mxu0
        %v1936 = vadd.f32 %v1733, %v1935
        %1937 = vdwg.mxu0
        %1938 = vst [vmem:[%s257] sm:$0xff] %v1756
        %1939 = vst [vmem:[%s257 + $0x8] sm:$0xff] %v1776
        %1940 = vst [vmem:[%s257 + $0x10] sm:$0xff] %v1796
        %1941 = vst [vmem:[%s257 + $0x18] sm:$0xff] %v1816
        %1942 = vst [vmem:[%s257 + $0x20] sm:$0xff] %v1836
        %1943 = vst [vmem:[%s257 + $0x28] sm:$0xff] %v1856
        %1944 = vst [vmem:[%s257 + $0x30] sm:$0xff] %v1876
        %1945 = vst [vmem:[%s257 + $0x38] sm:$0xff] %v1896
        %1946 = vst [vmem:[%s257 + $0x40] sm:$0xff] %v1916
        %1947 = vst [vmem:[%s257 + $0x48] sm:$0xff] %v1936
        %s1948 = sand.u32 %s159, 1
        %s1949 = scalar_lea.sflag [#allocation3], %s1948
        %s1950 = sand.u32 %s159, 1
        %s1951 = smul.addr %s1950, 80
        %s1952 = scalar_lea.vmem [#allocation2], %s1951
        // Predicated region
        $region45: #{net_nomatrix16_v2.1} parent=43 // pred_check
          %p1953 = pneg %p169
        $region46: #{net_nomatrix16_v2.1} parent=43 // pred_check_branch
          %1955 = sbr.rel (%p1953) target = $region48
        $region47: #{net_nomatrix16_v2.1} parent=43 // pred_region
          %s1956 = smul.u32 10, %s20
          %1958 = vsyncadd %s1949, 0
          %s1959 = smul.addr %s1956, 8
          %s1960 = scalar_lea.hbm %s6, %s1959
          %s1962 = sshll.u32 %s1952, 4
          %s1963 = int_to_ptr.vmem [resolvable:$true] %s1962
          %s1964 = sshll.u32 %s1960, 4
          %s1965 = int_to_ptr.hbm [resolvable:$true] %s1964
          %1967 = dma.vmem_to_hbm [thread:$0]  %s1963, 1280, %s1965, %s1949
        $region48: #{net_nomatrix16_v2.1} parent=43 // pred_fallthru
          _
      $region44: #{net_nomatrix16_v2.1} parent=5 // pred_fallthru
        _
      %p1968 = scmp.le.s32.totalorder 2, %s15
      // Predicated region
      $region49: #{net_nomatrix16_v2.1} parent=5 // pred_check
        %p1969 = pneg %p1968
      $region50: #{net_nomatrix16_v2.1} parent=5 // pred_check_branch
        %1971 = sbr.rel (%p1969) target = $region52
      $region51: #{net_nomatrix16_v2.1} parent=5 // pred_region
        %s1972 = ssub.s32 %s15, 2
        // Predicated region
        $region53: #{net_nomatrix16_v2.1} parent=51 // pred_check
          %p1973 = pneg %p175
        $region54: #{net_nomatrix16_v2.1} parent=51 // pred_check_branch
          %1975 = sbr.rel (%p1973) target = $region56
        $region55: #{net_nomatrix16_v2.1} parent=51 // pred_region
          %s1976 = sand.u32 %s160, 1
          %s1977 = scalar_lea.sflag [#allocation3], %s1976
          %s1978 = sand.u32 %s160, 1
          %s1979 = smul.addr %s1978, 80
          %s1980 = scalar_lea.vmem [#allocation2], %s1979
          %1982 = dma.done %s1977, 1280
        $region56: #{net_nomatrix16_v2.1} parent=51 // pred_fallthru
          _
      $region52: #{net_nomatrix16_v2.1} parent=5 // pred_fallthru
        _
    $region6: #{net_nomatrix16_v2.1} parent=1 // loop_footer
      %s19 = sadd.s32 1, %s15
    $region7: #{net_nomatrix16_v2.1} parent=1 // loop_footer_branch
      %14 = sbr.rel target = $region3
    $region8: #{net_nomatrix16_v2.1} parent=1 // loop_exit
      _
    %1983 = vsyncpa [#allocation3], 1
    %s1984 = scalar_lea.sflag [#allocation3], 1
    %1985 = vsyncpa %s1984, 1

</llo_original>
